<compile_context>
chip_gen: v6e
topology: v6e:2x2x1
jax: 0.10.0
libtpu: 0.0.40
codegen_flags: <defaults>
</compile_context>

<pallas_src>
import functools

import jax
import jax.numpy as jnp
from jax.experimental import pallas as pl
from jax.experimental.pallas import tpu as pltpu

# (in_features, out_features) for every Linear in DNN1 (PyTorch layout semantics).
LAYER_DIMS = [(2, 50), (50, 500), (500, 500), (500, 200), (200, 50), (50, 2)]
# Lane-padded storage shapes (layer-1 in-dim stays 2: it is computed on the VPU).
PADDED_DIMS = [(2, 128), (128, 512), (512, 512), (512, 256), (256, 128), (128, 128)]
OUT_PAD = PADDED_DIMS[-1][1]
OUT_TRUE = LAYER_DIMS[-1][1]


def _round_up(n, m):
    return (n + m - 1) // m * m


def _silu(v):
    # SiLU(x) = x * sigmoid(x); sigmoid's exp runs on the EUP (co-issues with MXU work).
    return v * jax.nn.sigmoid(v)


def mlp_kernel(x_ref,
               w1, b1, w2, b2, w3, b3, w4, b4, w5, b5, w6, b6,
               o_ref):
    """Forward pass for one (TB, ...) batch tile; weights are VMEM-resident."""
    x = x_ref[...]                                   # (TB, 2) f32
    # Layer 1: K=2 contraction -> two VPU broadcast-FMAs (skip an MXU round-trip).
    w1v = w1[...]                                    # (2, 128) f32, zero-padded cols
    h = x[:, 0:1] * w1v[0:1, :] + x[:, 1:2] * w1v[1:2, :] + b1[...]
    h = _silu(h)                                     # (TB, 128) f32

    # Layers 2..5: lane-dense bf16 MXU matmuls, f32 accumulate, f32 bias+SiLU.
    for w_ref, b_ref in ((w2, b2), (w3, b3), (w4, b4), (w5, b5)):
        w = w_ref[...]
        h = jnp.dot(h.astype(w.dtype), w, preferred_element_type=jnp.float32)
        h = _silu(h + b_ref[...])

    # Layer 6: no activation.
    w = w6[...]
    h = jnp.dot(h.astype(w.dtype), w, preferred_element_type=jnp.float32) + b6[...]
    o_ref[...] = h.astype(o_ref.dtype)               # (TB, 128) lane-dense store


def init_params(key):
    """PyTorch-style nn.Linear init: U(-k, k), k = 1/sqrt(fan_in).  Unpadded f32."""
    params = []
    for (fan_in, fan_out) in LAYER_DIMS:
        key, kw, kb = jax.random.split(key, 3)
        bound = 1.0 / jnp.sqrt(jnp.float32(fan_in))
        w = jax.random.uniform(kw, (fan_in, fan_out), jnp.float32, -bound, bound)
        b = jax.random.uniform(kb, (1, fan_out), jnp.float32, -bound, bound)
        params.append((w, b))
    return params


def prepare_params(params):
    """Zero-pad to lane-aligned shapes; cast MXU-fed weights (layers 2..6) to bf16."""
    prepped = []
    for idx, ((w, b), (rp, cp)) in enumerate(zip(params, PADDED_DIMS)):
        wp = jnp.pad(w, ((0, rp - w.shape[0]), (0, cp - w.shape[1])))
        bp = jnp.pad(b, ((0, 0), (0, cp - b.shape[1])))
        if idx > 0:
            wp = wp.astype(jnp.bfloat16)   # layer 1 stays f32 (VPU path, no bf16 VPU on v5e)
        prepped.append((wp, bp.astype(jnp.float32)))
    return prepped


@functools.partial(jax.jit, static_argnames=("batch_tile",))
def net_forward(x, padded_params, *, batch_tile=512):
    B = x.shape[0]
    tb = min(batch_tile, _round_up(B, 8))
    B_pad = _round_up(B, tb)
    if B_pad != B:
        x = jnp.pad(x, ((0, B_pad - B), (0, 0)))

    flat = []
    for w, b in padded_params:
        flat += [w, b]

    # Weights/biases: full-array blocks with constant index_map -> VMEM-resident.
    param_specs = [pl.BlockSpec(a.shape, lambda i: (0, 0)) for a in flat]

    out = pl.pallas_call(
        mlp_kernel,
        out_shape=jax.ShapeDtypeStruct((B_pad, OUT_PAD), jnp.float32),
        grid=(B_pad // tb,),
        in_specs=[pl.BlockSpec((tb, 2), lambda i: (i, 0))] + param_specs,
        out_specs=pl.BlockSpec((tb, OUT_PAD), lambda i: (i, 0)),
        compiler_params=pltpu.CompilerParams(
            dimension_semantics=("parallel",),
            vmem_limit_bytes=32 * 1024 * 1024,
        ),
    )(x, *flat)
    return out[:B, :OUT_TRUE]


def net_forward_ref_f32(x, params):
    """Pure-JAX f32 reference matching the PyTorch module semantics."""
    h = x
    for i, (w, b) in enumerate(params):
        h = h @ w + b
        if i < len(params) - 1:
            h = _silu(h)
    return h


def net_forward_ref_bf16(x, padded_params):
    """Pure-JAX reference replicating the kernel's bf16-matmul / f32-accumulate path."""
    w1, b1 = padded_params[0]
    h = x[:, 0:1] * w1[0:1, :] + x[:, 1:2] * w1[1:2, :] + b1
    h = _silu(h)
    n = len(padded_params)
    for i, (w, b) in enumerate(padded_params[1:], start=1):
        h = jnp.dot(h.astype(w.dtype), w, preferred_element_type=jnp.float32) + b
        if i < n - 1:
            h = _silu(h)
    return h[:, :OUT_TRUE]


if __name__ == "__main__":
    key = jax.random.PRNGKey(0)
    key, kx = jax.random.split(key)

    batch = 8
    x = jax.random.normal(kx, (batch, 2), jnp.float32)

    params = init_params(key)
    padded = prepare_params(params)

    out = jax.block_until_ready(net_forward(x, padded))
    assert out.shape == (batch, OUT_TRUE), out.shape

    ref_bf16 = net_forward_ref_bf16(x, padded)
    ref_f32 = net_forward_ref_f32(x, params)
    assert jnp.allclose(out, ref_bf16, atol=2e-3, rtol=2e-3), "mismatch vs bf16-semantics ref"
    assert jnp.allclose(out, ref_f32, atol=3e-2, rtol=3e-2), "mismatch vs f32 reference"

    # Exercise the batch grid (multiple tiles + padded remainder).
    key, kx2 = jax.random.split(key)
    xb = jax.random.normal(kx2, (1040, 2), jnp.float32)
    outb = jax.block_until_ready(net_forward(xb, padded))
    assert outb.shape == (1040, OUT_TRUE), outb.shape
    refb = net_forward_ref_bf16(xb, padded)
    assert jnp.allclose(outb, refb, atol=2e-3, rtol=2e-3), "grid-path mismatch vs reference"

    print("KERNEL_OK")
</pallas_src>

<mosaic_0001>
module attributes {stable_mosaic.version = 11 : i64} {
  func.func @mlp_kernel(%arg0: i32, %arg1: memref<8x2xf32, #tpu.memory_space<vmem>>, %arg2: memref<2x128xf32, #tpu.memory_space<vmem>>, %arg3: memref<1x128xf32, #tpu.memory_space<vmem>>, %arg4: memref<128x512xbf16, #tpu.memory_space<vmem>>, %arg5: memref<1x512xf32, #tpu.memory_space<vmem>>, %arg6: memref<512x512xbf16, #tpu.memory_space<vmem>>, %arg7: memref<1x512xf32, #tpu.memory_space<vmem>>, %arg8: memref<512x256xbf16, #tpu.memory_space<vmem>>, %arg9: memref<1x256xf32, #tpu.memory_space<vmem>>, %arg10: memref<256x128xbf16, #tpu.memory_space<vmem>>, %arg11: memref<1x128xf32, #tpu.memory_space<vmem>>, %arg12: memref<128x128xbf16, #tpu.memory_space<vmem>>, %arg13: memref<1x128xf32, #tpu.memory_space<vmem>>, %arg14: memref<8x128xf32, #tpu.memory_space<vmem>>) attributes {dimension_semantics = [#tpu.dimension_semantics<parallel>], iteration_bounds = array<i64: 1>, scalar_prefetch = 0 : i64, scratch_operands = 0 : i64, tpu.core_type = #tpu.core_type<tc>, window_params = [{transform_indices = @transform_0, window_bounds = array<i64: 8, 2>}, {pipeline_mode = #tpu.pipeline_mode<synchronous>, transform_indices = @transform_1, window_bounds = array<i64: 2, 128>}, {pipeline_mode = #tpu.pipeline_mode<synchronous>, transform_indices = @transform_2, window_bounds = array<i64: 1, 128>}, {pipeline_mode = #tpu.pipeline_mode<synchronous>, transform_indices = @transform_3, window_bounds = array<i64: 128, 512>}, {pipeline_mode = #tpu.pipeline_mode<synchronous>, transform_indices = @transform_4, window_bounds = array<i64: 1, 512>}, {pipeline_mode = #tpu.pipeline_mode<synchronous>, transform_indices = @transform_5, window_bounds = array<i64: 512, 512>}, {pipeline_mode = #tpu.pipeline_mode<synchronous>, transform_indices = @transform_6, window_bounds = array<i64: 1, 512>}, {pipeline_mode = #tpu.pipeline_mode<synchronous>, transform_indices = @transform_7, window_bounds = array<i64: 512, 256>}, {pipeline_mode = #tpu.pipeline_mode<synchronous>, transform_indices = @transform_8, window_bounds = array<i64: 1, 256>}, {pipeline_mode = #tpu.pipeline_mode<synchronous>, transform_indices = @transform_9, window_bounds = array<i64: 256, 128>}, {pipeline_mode = #tpu.pipeline_mode<synchronous>, transform_indices = @transform_10, window_bounds = array<i64: 1, 128>}, {pipeline_mode = #tpu.pipeline_mode<synchronous>, transform_indices = @transform_11, window_bounds = array<i64: 128, 128>}, {pipeline_mode = #tpu.pipeline_mode<synchronous>, transform_indices = @transform_12, window_bounds = array<i64: 1, 128>}, {transform_indices = @transform_13, window_bounds = array<i64: 8, 128>}]} {
    %c0 = arith.constant 0 : index
    %c0_0 = arith.constant 0 : index
    %0 = vector.load %arg1[%c0, %c0_0] : memref<8x2xf32, #tpu.memory_space<vmem>>, vector<8x2xf32>
    %c0_1 = arith.constant 0 : index
    %c0_2 = arith.constant 0 : index
    %1 = vector.load %arg2[%c0_1, %c0_2] : memref<2x128xf32, #tpu.memory_space<vmem>>, vector<2x128xf32>
    %2 = vector.extract_strided_slice %0 {offsets = [0, 0], sizes = [8, 1], strides = [1, 1]} : vector<8x2xf32> to vector<8x1xf32>
    %3 = vector.extract_strided_slice %1 {offsets = [0, 0], sizes = [1, 128], strides = [1, 1]} : vector<2x128xf32> to vector<1x128xf32>
    %4 = vector.broadcast %2 : vector<8x1xf32> to vector<8x128xf32>
    %5 = vector.broadcast %3 : vector<1x128xf32> to vector<8x128xf32>
    %6 = arith.mulf %4, %5 : vector<8x128xf32>
    %7 = vector.extract_strided_slice %0 {offsets = [0, 1], sizes = [8, 1], strides = [1, 1]} : vector<8x2xf32> to vector<8x1xf32>
    %8 = vector.extract_strided_slice %1 {offsets = [1, 0], sizes = [1, 128], strides = [1, 1]} : vector<2x128xf32> to vector<1x128xf32>
    %9 = vector.broadcast %7 : vector<8x1xf32> to vector<8x128xf32>
    %10 = vector.broadcast %8 : vector<1x128xf32> to vector<8x128xf32>
    %11 = arith.mulf %9, %10 : vector<8x128xf32>
    %12 = arith.addf %6, %11 : vector<8x128xf32>
    %c0_3 = arith.constant 0 : index
    %c0_4 = arith.constant 0 : index
    %13 = vector.load %arg3[%c0_3, %c0_4] : memref<1x128xf32, #tpu.memory_space<vmem>>, vector<1x128xf32>
    %14 = vector.broadcast %13 : vector<1x128xf32> to vector<8x128xf32>
    %15 = arith.addf %12, %14 : vector<8x128xf32>
    %16 = arith.negf %15 : vector<8x128xf32>
    %17 = math.exp %16 : vector<8x128xf32>
    %cst = arith.constant 1.000000e+00 : f32
    %18 = vector.broadcast %cst : f32 to vector<8x128xf32>
    %19 = arith.addf %18, %17 : vector<8x128xf32>
    %20 = arith.divf %18, %19 : vector<8x128xf32>
    %21 = arith.mulf %15, %20 : vector<8x128xf32>
    %c0_5 = arith.constant 0 : index
    %c0_6 = arith.constant 0 : index
    %22 = vector.load %arg4[%c0_5, %c0_6] : memref<128x512xbf16, #tpu.memory_space<vmem>>, vector<128x512xbf16>
    %23 = arith.truncf %21 : vector<8x128xf32> to vector<8x128xbf16>
    %cst_7 = arith.constant dense<0.000000e+00> : vector<8x512xf32>
    %24 = tpu.matmul %23, %22, %cst_7 {dimension_numbers = #tpu.dot_dimension_numbers<[1], [0], [0], [1], [0, 0, 1, 1], [], []>} : vector<8x128xbf16>, vector<128x512xbf16>, vector<8x512xf32> -> vector<8x512xf32>
    %c0_8 = arith.constant 0 : index
    %c0_9 = arith.constant 0 : index
    %25 = vector.load %arg5[%c0_8, %c0_9] : memref<1x512xf32, #tpu.memory_space<vmem>>, vector<1x512xf32>
    %26 = vector.broadcast %25 : vector<1x512xf32> to vector<8x512xf32>
    %27 = arith.addf %24, %26 : vector<8x512xf32>
    %28 = arith.negf %27 : vector<8x512xf32>
    %29 = math.exp %28 : vector<8x512xf32>
    %cst_10 = arith.constant 1.000000e+00 : f32
    %30 = vector.broadcast %cst_10 : f32 to vector<8x512xf32>
    %31 = arith.addf %30, %29 : vector<8x512xf32>
    %32 = arith.divf %30, %31 : vector<8x512xf32>
    %33 = arith.mulf %27, %32 : vector<8x512xf32>
    %c0_11 = arith.constant 0 : index
    %c0_12 = arith.constant 0 : index
    %34 = vector.load %arg6[%c0_11, %c0_12] : memref<512x512xbf16, #tpu.memory_space<vmem>>, vector<512x512xbf16>
    %35 = arith.truncf %33 : vector<8x512xf32> to vector<8x512xbf16>
    %cst_13 = arith.constant dense<0.000000e+00> : vector<8x512xf32>
    %36 = tpu.matmul %35, %34, %cst_13 {dimension_numbers = #tpu.dot_dimension_numbers<[1], [0], [0], [1], [0, 0, 1, 1], [], []>} : vector<8x512xbf16>, vector<512x512xbf16>, vector<8x512xf32> -> vector<8x512xf32>
    %c0_14 = arith.constant 0 : index
    %c0_15 = arith.constant 0 : index
    %37 = vector.load %arg7[%c0_14, %c0_15] : memref<1x512xf32, #tpu.memory_space<vmem>>, vector<1x512xf32>
    %38 = vector.broadcast %37 : vector<1x512xf32> to vector<8x512xf32>
    %39 = arith.addf %36, %38 : vector<8x512xf32>
    %40 = arith.negf %39 : vector<8x512xf32>
    %41 = math.exp %40 : vector<8x512xf32>
    %cst_16 = arith.constant 1.000000e+00 : f32
    %42 = vector.broadcast %cst_16 : f32 to vector<8x512xf32>
    %43 = arith.addf %42, %41 : vector<8x512xf32>
    %44 = arith.divf %42, %43 : vector<8x512xf32>
    %45 = arith.mulf %39, %44 : vector<8x512xf32>
    %c0_17 = arith.constant 0 : index
    %c0_18 = arith.constant 0 : index
    %46 = vector.load %arg8[%c0_17, %c0_18] : memref<512x256xbf16, #tpu.memory_space<vmem>>, vector<512x256xbf16>
    %47 = arith.truncf %45 : vector<8x512xf32> to vector<8x512xbf16>
    %cst_19 = arith.constant dense<0.000000e+00> : vector<8x256xf32>
    %48 = tpu.matmul %47, %46, %cst_19 {dimension_numbers = #tpu.dot_dimension_numbers<[1], [0], [0], [1], [0, 0, 1, 1], [], []>} : vector<8x512xbf16>, vector<512x256xbf16>, vector<8x256xf32> -> vector<8x256xf32>
    %c0_20 = arith.constant 0 : index
    %c0_21 = arith.constant 0 : index
    %49 = vector.load %arg9[%c0_20, %c0_21] : memref<1x256xf32, #tpu.memory_space<vmem>>, vector<1x256xf32>
    %50 = vector.broadcast %49 : vector<1x256xf32> to vector<8x256xf32>
    %51 = arith.addf %48, %50 : vector<8x256xf32>
    %52 = arith.negf %51 : vector<8x256xf32>
    %53 = math.exp %52 : vector<8x256xf32>
    %cst_22 = arith.constant 1.000000e+00 : f32
    %54 = vector.broadcast %cst_22 : f32 to vector<8x256xf32>
    %55 = arith.addf %54, %53 : vector<8x256xf32>
    %56 = arith.divf %54, %55 : vector<8x256xf32>
    %57 = arith.mulf %51, %56 : vector<8x256xf32>
    %c0_23 = arith.constant 0 : index
    %c0_24 = arith.constant 0 : index
    %58 = vector.load %arg10[%c0_23, %c0_24] : memref<256x128xbf16, #tpu.memory_space<vmem>>, vector<256x128xbf16>
    %59 = arith.truncf %57 : vector<8x256xf32> to vector<8x256xbf16>
    %cst_25 = arith.constant dense<0.000000e+00> : vector<8x128xf32>
    %60 = tpu.matmul %59, %58, %cst_25 {dimension_numbers = #tpu.dot_dimension_numbers<[1], [0], [0], [1], [0, 0, 1, 1], [], []>} : vector<8x256xbf16>, vector<256x128xbf16>, vector<8x128xf32> -> vector<8x128xf32>
    %c0_26 = arith.constant 0 : index
    %c0_27 = arith.constant 0 : index
    %61 = vector.load %arg11[%c0_26, %c0_27] : memref<1x128xf32, #tpu.memory_space<vmem>>, vector<1x128xf32>
    %62 = vector.broadcast %61 : vector<1x128xf32> to vector<8x128xf32>
    %63 = arith.addf %60, %62 : vector<8x128xf32>
    %64 = arith.negf %63 : vector<8x128xf32>
    %65 = math.exp %64 : vector<8x128xf32>
    %cst_28 = arith.constant 1.000000e+00 : f32
    %66 = vector.broadcast %cst_28 : f32 to vector<8x128xf32>
    %67 = arith.addf %66, %65 : vector<8x128xf32>
    %68 = arith.divf %66, %67 : vector<8x128xf32>
    %69 = arith.mulf %63, %68 : vector<8x128xf32>
    %c0_29 = arith.constant 0 : index
    %c0_30 = arith.constant 0 : index
    %70 = vector.load %arg12[%c0_29, %c0_30] : memref<128x128xbf16, #tpu.memory_space<vmem>>, vector<128x128xbf16>
    %71 = arith.truncf %69 : vector<8x128xf32> to vector<8x128xbf16>
    %cst_31 = arith.constant dense<0.000000e+00> : vector<8x128xf32>
    %72 = tpu.matmul %71, %70, %cst_31 {dimension_numbers = #tpu.dot_dimension_numbers<[1], [0], [0], [1], [0, 0, 1, 1], [], []>} : vector<8x128xbf16>, vector<128x128xbf16>, vector<8x128xf32> -> vector<8x128xf32>
    %c0_32 = arith.constant 0 : index
    %c0_33 = arith.constant 0 : index
    %73 = vector.load %arg13[%c0_32, %c0_33] : memref<1x128xf32, #tpu.memory_space<vmem>>, vector<1x128xf32>
    %74 = vector.broadcast %73 : vector<1x128xf32> to vector<8x128xf32>
    %75 = arith.addf %72, %74 : vector<8x128xf32>
    %c0_34 = arith.constant 0 : index
    %c0_35 = arith.constant 0 : index
    %76 = vector.load %arg14[%c0_34, %c0_35] : memref<8x128xf32, #tpu.memory_space<vmem>>, vector<8x128xf32>
    tpu.vector_store %arg14[%c0_34, %c0_35], %75 {strides = array<i32>} : memref<8x128xf32, #tpu.memory_space<vmem>>, vector<8x128xf32>,
    return
  }
  func.func @transform_0(%arg0: i32) -> (i32, i32) {
    %c0_i32 = arith.constant 0 : i32
    %c0_i32_0 = arith.constant 0 : i32
    return %arg0, %c0_i32 : i32, i32
  }
  func.func @transform_1(%arg0: i32) -> (i32, i32) {
    %c0_i32 = arith.constant 0 : i32
    %c0_i32_0 = arith.constant 0 : i32
    %c0_i32_1 = arith.constant 0 : i32
    return %c0_i32, %c0_i32_0 : i32, i32
  }
  func.func @transform_2(%arg0: i32) -> (i32, i32) {
    %c0_i32 = arith.constant 0 : i32
    %c0_i32_0 = arith.constant 0 : i32
    %c0_i32_1 = arith.constant 0 : i32
    return %c0_i32, %c0_i32_0 : i32, i32
  }
  func.func @transform_3(%arg0: i32) -> (i32, i32) {
    %c0_i32 = arith.constant 0 : i32
    %c0_i32_0 = arith.constant 0 : i32
    %c0_i32_1 = arith.constant 0 : i32
    return %c0_i32, %c0_i32_0 : i32, i32
  }
  func.func @transform_4(%arg0: i32) -> (i32, i32) {
    %c0_i32 = arith.constant 0 : i32
    %c0_i32_0 = arith.constant 0 : i32
    %c0_i32_1 = arith.constant 0 : i32
    return %c0_i32, %c0_i32_0 : i32, i32
  }
  func.func @transform_5(%arg0: i32) -> (i32, i32) {
    %c0_i32 = arith.constant 0 : i32
    %c0_i32_0 = arith.constant 0 : i32
    %c0_i32_1 = arith.constant 0 : i32
    return %c0_i32, %c0_i32_0 : i32, i32
  }
  func.func @transform_6(%arg0: i32) -> (i32, i32) {
    %c0_i32 = arith.constant 0 : i32
    %c0_i32_0 = arith.constant 0 : i32
    %c0_i32_1 = arith.constant 0 : i32
    return %c0_i32, %c0_i32_0 : i32, i32
  }
  func.func @transform_7(%arg0: i32) -> (i32, i32) {
    %c0_i32 = arith.constant 0 : i32
    %c0_i32_0 = arith.constant 0 : i32
    %c0_i32_1 = arith.constant 0 : i32
    return %c0_i32, %c0_i32_0 : i32, i32
  }
  func.func @transform_8(%arg0: i32) -> (i32, i32) {
    %c0_i32 = arith.constant 0 : i32
    %c0_i32_0 = arith.constant 0 : i32
    %c0_i32_1 = arith.constant 0 : i32
    return %c0_i32, %c0_i32_0 : i32, i32
  }
  func.func @transform_9(%arg0: i32) -> (i32, i32) {
    %c0_i32 = arith.constant 0 : i32
    %c0_i32_0 = arith.constant 0 : i32
    %c0_i32_1 = arith.constant 0 : i32
    return %c0_i32, %c0_i32_0 : i32, i32
  }
  func.func @transform_10(%arg0: i32) -> (i32, i32) {
    %c0_i32 = arith.constant 0 : i32
    %c0_i32_0 = arith.constant 0 : i32
    %c0_i32_1 = arith.constant 0 : i32
    return %c0_i32, %c0_i32_0 : i32, i32
  }
  func.func @transform_11(%arg0: i32) -> (i32, i32) {
    %c0_i32 = arith.constant 0 : i32
    %c0_i32_0 = arith.constant 0 : i32
    %c0_i32_1 = arith.constant 0 : i32
    return %c0_i32, %c0_i32_0 : i32, i32
  }
  func.func @transform_12(%arg0: i32) -> (i32, i32) {
    %c0_i32 = arith.constant 0 : i32
    %c0_i32_0 = arith.constant 0 : i32
    %c0_i32_1 = arith.constant 0 : i32
    return %c0_i32, %c0_i32_0 : i32, i32
  }
  func.func @transform_13(%arg0: i32) -> (i32, i32) {
    %c0_i32 = arith.constant 0 : i32
    %c0_i32_0 = arith.constant 0 : i32
    return %arg0, %c0_i32 : i32, i32
  }
}

</mosaic_0001>

<llo_original>
// kernel: net_forward.1
$region0: #{net_forward.1}
  #allocation0 [shape = 'u32[]', space=smem, size = 0x4, offset = 0x4, fixed_abs, tag = 'smem constant byte address 0x4 - core index']
  #allocation1 [shape = 'u32[144,128]{1,0:T(1,128)}', space=vmem, size = 0x12000, scoped, tag = 'internal scratch']
  %s0 = inlined_call_operand.vmem [shape: f32[8,2], index: 0, kind: input, shape index: {}]
  %s1 = inlined_call_operand.vmem [shape: f32[2,128], index: 1, kind: input, shape index: {}]
  %s2 = inlined_call_operand.vmem [shape: f32[1,128], index: 2, kind: input, shape index: {}]
  %s3 = inlined_call_operand.hbm [shape: bf16[128,512], index: 3, kind: input, shape index: {}]
  %s4 = inlined_call_operand.vmem [shape: f32[1,512], index: 4, kind: input, shape index: {}]
  %s5 = inlined_call_operand.hbm [shape: bf16[512,512], index: 5, kind: input, shape index: {}]
  %s6 = inlined_call_operand.vmem [shape: f32[1,512], index: 6, kind: input, shape index: {}]
  %s7 = inlined_call_operand.hbm [shape: bf16[512,256], index: 7, kind: input, shape index: {}]
  %s8 = inlined_call_operand.vmem [shape: f32[1,256], index: 8, kind: input, shape index: {}]
  %s9 = inlined_call_operand.hbm [shape: bf16[256,128], index: 9, kind: input, shape index: {}]
  %s10 = inlined_call_operand.vmem [shape: f32[1,128], index: 10, kind: input, shape index: {}]
  %s11 = inlined_call_operand.hbm [shape: bf16[128,128], index: 11, kind: input, shape index: {}]
  %s12 = inlined_call_operand.vmem [shape: f32[1,128], index: 12, kind: input, shape index: {}]
  %s13 = inlined_call_operand.vmem [shape: f32[8,128], index: 13, kind: output, shape index: {}]
  %s14 = sld [smem:[#allocation0]]
  $region82: #{net_forward.1} parent=0
    _
  %s16 = ssub.s32 1, %s14
  %s17 = scalar_select 0, %s16, %s14
  $region1: #{net_forward.1} parent=0
    #allocation2 [shape = 'u8[131072]{0}', space=vmem, size = 0x20000, scoped, tag = 'input window, operand 3, single buffered']
    #allocation3 [shape = 's32[1]{0}', space=sflag, size = 0x4, scoped, tag = 'scoped memory for net_forward.1']
    #allocation4 [shape = 'u8[524288]{0}', space=vmem, size = 0x80000, scoped, tag = 'input window, operand 5, single buffered']
    #allocation5 [shape = 's32[1]{0}', space=sflag, size = 0x4, scoped, tag = 'scoped memory for net_forward.1']
    #allocation6 [shape = 'u8[262144]{0}', space=vmem, size = 0x40000, scoped, tag = 'input window, operand 7, single buffered']
    #allocation7 [shape = 'u8[65536]{0}', space=vmem, size = 0x10000, scoped, tag = 'input window, operand 9, single buffered']
    #allocation8 [shape = 's32[1]{0}', space=sflag, size = 0x4, scoped, tag = 'scoped memory for net_forward.1']
    #allocation9 [shape = 'u8[32768]{0}', space=vmem, size = 0x8000, scoped, tag = 'input window, operand 11, single buffered']
    %18 = vsyncpa [#allocation3], 0
    %19 = vsyncpa [#allocation5], 0
    %20 = vsyncpa [#allocation8], 0
    // Predicated region
    $region2: #{net_forward.1} parent=1 // pred_check
      _
    $region3: #{net_forward.1} parent=1 // pred_check_branch
      %22 = sbr.rel (0) target = $region5
    $region4: #{net_forward.1} parent=1 // pred_region
      _
    $region5: #{net_forward.1} parent=1 // pred_fallthru
      _
    // Predicated region
    $region6: #{net_forward.1} parent=1 // pred_check
      _
    $region7: #{net_forward.1} parent=1 // pred_check_branch
      %24 = sbr.rel (0) target = $region9
    $region8: #{net_forward.1} parent=1 // pred_region
      _
    $region9: #{net_forward.1} parent=1 // pred_fallthru
      _
    // Predicated region
    $region10: #{net_forward.1} parent=1 // pred_check
      _
    $region11: #{net_forward.1} parent=1 // pred_check_branch
      %26 = sbr.rel (0) target = $region13
    $region12: #{net_forward.1} parent=1 // pred_region
      _
    $region13: #{net_forward.1} parent=1 // pred_fallthru
      _
    // Predicated region
    $region14: #{net_forward.1} parent=1 // pred_check
      _
    $region15: #{net_forward.1} parent=1 // pred_check_branch
      %28 = sbr.rel (0) target = $region17
    $region16: #{net_forward.1} parent=1 // pred_region
      %s30 = ssub.s32 4096, 4096
      %31 = vsyncadd [#allocation3], %s30
      %s32 = sshll.u32 [#allocation2], 4
      %s33 = int_to_ptr.vmem [resolvable:$true] %s32
      %38 = dma.hbm_to_vmem [thread:$0]  %s3, 4096, %s33, [#allocation3], 256, 256, 16
    $region17: #{net_forward.1} parent=1 // pred_fallthru
      _
    // Predicated region
    $region18: #{net_forward.1} parent=1 // pred_check
      _
    $region19: #{net_forward.1} parent=1 // pred_check_branch
      %40 = sbr.rel (0) target = $region21
    $region20: #{net_forward.1} parent=1 // pred_region
      _
    $region21: #{net_forward.1} parent=1 // pred_fallthru
      _
    // Predicated region
    $region22: #{net_forward.1} parent=1 // pred_check
      _
    $region23: #{net_forward.1} parent=1 // pred_check_branch
      %42 = sbr.rel (0) target = $region25
    $region24: #{net_forward.1} parent=1 // pred_region
      %s44 = ssub.s32 16384, 16384
      %45 = vsyncadd [#allocation5], %s44
      %s46 = sshll.u32 [#allocation4], 4
      %s47 = int_to_ptr.vmem [resolvable:$true] %s46
      %52 = dma.hbm_to_vmem [thread:$0]  %s5, 16384, %s47, [#allocation5], 256, 256, 16
    $region25: #{net_forward.1} parent=1 // pred_fallthru
      _
    // Predicated region
    $region26: #{net_forward.1} parent=1 // pred_check
      _
    $region27: #{net_forward.1} parent=1 // pred_check_branch
      %54 = sbr.rel (0) target = $region29
    $region28: #{net_forward.1} parent=1 // pred_region
      _
    $region29: #{net_forward.1} parent=1 // pred_fallthru
      _
    // Predicated region
    $region30: #{net_forward.1} parent=1 // pred_check
      _
    $region31: #{net_forward.1} parent=1 // pred_check_branch
      %56 = sbr.rel (0) target = $region33
    $region32: #{net_forward.1} parent=1 // pred_region
      %s58 = ssub.s32 8192, 8192
      %59 = vsyncadd [#allocation5], %s58
      %s60 = sshll.u32 [#allocation6], 4
      %s61 = int_to_ptr.vmem [resolvable:$true] %s60
      %66 = dma.hbm_to_vmem [thread:$0]  %s7, 8192, %s61, [#allocation5], 128, 128, 8
    $region33: #{net_forward.1} parent=1 // pred_fallthru
      _
    // Predicated region
    $region34: #{net_forward.1} parent=1 // pred_check
      _
    $region35: #{net_forward.1} parent=1 // pred_check_branch
      %68 = sbr.rel (0) target = $region37
    $region36: #{net_forward.1} parent=1 // pred_region
      _
    $region37: #{net_forward.1} parent=1 // pred_fallthru
      _
    // Predicated region
    $region38: #{net_forward.1} parent=1 // pred_check
      _
    $region39: #{net_forward.1} parent=1 // pred_check_branch
      %70 = sbr.rel (0) target = $region41
    $region40: #{net_forward.1} parent=1 // pred_region
      %s72 = ssub.s32 2048, 2048
      %73 = vsyncadd [#allocation8], %s72
      %s74 = sshll.u32 [#allocation7], 4
      %s75 = int_to_ptr.vmem [resolvable:$true] %s74
      %80 = dma.hbm_to_vmem [thread:$0]  %s9, 2048, %s75, [#allocation8], 64, 64, 4
    $region41: #{net_forward.1} parent=1 // pred_fallthru
      _
    // Predicated region
    $region42: #{net_forward.1} parent=1 // pred_check
      _
    $region43: #{net_forward.1} parent=1 // pred_check_branch
      %82 = sbr.rel (0) target = $region45
    $region44: #{net_forward.1} parent=1 // pred_region
      _
    $region45: #{net_forward.1} parent=1 // pred_fallthru
      _
    // Predicated region
    $region46: #{net_forward.1} parent=1 // pred_check
      _
    $region47: #{net_forward.1} parent=1 // pred_check_branch
      %84 = sbr.rel (0) target = $region49
    $region48: #{net_forward.1} parent=1 // pred_region
      %s86 = ssub.s32 1024, 1024
      %87 = vsyncadd [#allocation8], %s86
      %s88 = sshll.u32 [#allocation9], 4
      %s89 = int_to_ptr.vmem [resolvable:$true] %s88
      %94 = dma.hbm_to_vmem [thread:$0]  %s11, 1024, %s89, [#allocation8], 64, 64, 4
    $region49: #{net_forward.1} parent=1 // pred_fallthru
      _
    // Predicated region
    $region50: #{net_forward.1} parent=1 // pred_check
      _
    $region51: #{net_forward.1} parent=1 // pred_check_branch
      %96 = sbr.rel (0) target = $region53
    $region52: #{net_forward.1} parent=1 // pred_region
      _
    $region53: #{net_forward.1} parent=1 // pred_fallthru
      _
    // Predicated region
    $region54: #{net_forward.1} parent=1 // pred_check
      _
    $region55: #{net_forward.1} parent=1 // pred_check_branch
      %98 = sbr.rel (0) target = $region57
    $region56: #{net_forward.1} parent=1 // pred_region
      %99 = dma.done [#allocation3], 4096
    $region57: #{net_forward.1} parent=1 // pred_fallthru
      _
    // Predicated region
    $region58: #{net_forward.1} parent=1 // pred_check
      _
    $region59: #{net_forward.1} parent=1 // pred_check_branch
      %101 = sbr.rel (0) target = $region61
    $region60: #{net_forward.1} parent=1 // pred_region
      %102 = dma.done [#allocation5], 16384
    $region61: #{net_forward.1} parent=1 // pred_fallthru
      _
    // Predicated region
    $region62: #{net_forward.1} parent=1 // pred_check
      _
    $region63: #{net_forward.1} parent=1 // pred_check_branch
      %104 = sbr.rel (0) target = $region65
    $region64: #{net_forward.1} parent=1 // pred_region
      %105 = dma.done [#allocation5], 8192
    $region65: #{net_forward.1} parent=1 // pred_fallthru
      _
    // Predicated region
    $region66: #{net_forward.1} parent=1 // pred_check
      _
    $region67: #{net_forward.1} parent=1 // pred_check_branch
      %107 = sbr.rel (0) target = $region69
    $region68: #{net_forward.1} parent=1 // pred_region
      %108 = dma.done [#allocation8], 2048
    $region69: #{net_forward.1} parent=1 // pred_fallthru
      _
    // Predicated region
    $region70: #{net_forward.1} parent=1 // pred_check
      _
    $region71: #{net_forward.1} parent=1 // pred_check_branch
      %110 = sbr.rel (0) target = $region73
    $region72: #{net_forward.1} parent=1 // pred_region
      %111 = dma.done [#allocation8], 1024
    $region73: #{net_forward.1} parent=1 // pred_fallthru
      _
    %v113 = vld [vmem:[%s0] sm:$0xff]
    %v114 = vld [vmem:[%s1] sm:$0x3]
    %116 = vset.pattern.permute.xlu0 0
    %117 = vperm.xlu0 %116, %v113
    %v118 = vpop.permute.xlu0 %117
    %v120 = vlaneseq
    %v121 = vshrl.u32 %v120, 7
    %v122 = vsub.s32 0, %v121
    %v123 = vrot.slane %v114, %v122
    %v124 = vmul.f32 %v118, %v123
    %125 = vset.pattern.permute.xlu0 1
    %126 = vperm.xlu0 %125, %v113
    %v127 = vpop.permute.xlu0 %126
    %v129 = vlaneseq
    %v130 = vshrl.u32 %v129, 7
    %v131 = vsub.s32 1, %v130
    %v132 = vrot.slane %v114, %v131
    %v133 = vmul.f32 %v127, %v132
    %v134 = vadd.f32 %v124, %v133
    %v135 = vld [vmem:[%s2] sm:$0x1]
    %v137 = vlaneseq
    %v138 = vshrl.u32 %v137, 7
    %v139 = vsub.s32 0, %v138
    %v140 = vrot.slane %v135, %v139
    %v142 = vadd.f32 %v134, %v140
    %v143 = vxor.u32 %v142, 2147483648
    %v144 = vmul.f32 %v143, 1.442695
    %v145 = vpow.pop %v144
    %v146 = vadd.f32 %v145, 1.0
    %v147 = vrcp.pop %v146
    %v148 = vmul.f32 1.0, %v147
    %v149 = vmul.f32 %v142, %v148
    %v150 = vld [vmem:[#allocation2] sm:$0xff]
    %v151 = vld [vmem:[#allocation2 + $0x8] sm:$0xff]
    %v152 = vld [vmem:[#allocation2 + $0x10] sm:$0xff]
    %v153 = vld [vmem:[#allocation2 + $0x18] sm:$0xff]
    %v154 = vld [vmem:[#allocation2 + $0x20] sm:$0xff]
    %v155 = vld [vmem:[#allocation2 + $0x28] sm:$0xff]
    %v156 = vld [vmem:[#allocation2 + $0x30] sm:$0xff]
    %v157 = vld [vmem:[#allocation2 + $0x38] sm:$0xff]
    %v158 = vld [vmem:[#allocation2 + $0x40] sm:$0xff]
    %v159 = vld [vmem:[#allocation2 + $0x48] sm:$0xff]
    %v160 = vld [vmem:[#allocation2 + $0x50] sm:$0xff]
    %v161 = vld [vmem:[#allocation2 + $0x58] sm:$0xff]
    %v162 = vld [vmem:[#allocation2 + $0x60] sm:$0xff]
    %v163 = vld [vmem:[#allocation2 + $0x68] sm:$0xff]
    %v164 = vld [vmem:[#allocation2 + $0x70] sm:$0xff]
    %v165 = vld [vmem:[#allocation2 + $0x78] sm:$0xff]
    %v166 = vld [vmem:[#allocation2 + $0x80] sm:$0xff]
    %v167 = vld [vmem:[#allocation2 + $0x88] sm:$0xff]
    %v168 = vld [vmem:[#allocation2 + $0x90] sm:$0xff]
    %v169 = vld [vmem:[#allocation2 + $0x98] sm:$0xff]
    %v170 = vld [vmem:[#allocation2 + $0xa0] sm:$0xff]
    %v171 = vld [vmem:[#allocation2 + $0xa8] sm:$0xff]
    %v172 = vld [vmem:[#allocation2 + $0xb0] sm:$0xff]
    %v173 = vld [vmem:[#allocation2 + $0xb8] sm:$0xff]
    %v174 = vld [vmem:[#allocation2 + $0xc0] sm:$0xff]
    %v175 = vld [vmem:[#allocation2 + $0xc8] sm:$0xff]
    %v176 = vld [vmem:[#allocation2 + $0xd0] sm:$0xff]
    %v177 = vld [vmem:[#allocation2 + $0xd8] sm:$0xff]
    %v178 = vld [vmem:[#allocation2 + $0xe0] sm:$0xff]
    %v179 = vld [vmem:[#allocation2 + $0xe8] sm:$0xff]
    %v180 = vld [vmem:[#allocation2 + $0xf0] sm:$0xff]
    %v181 = vld [vmem:[#allocation2 + $0xf8] sm:$0xff]
    %v182 = vpack.c.bf16 %v149, %v149
    %v183 = vld [vmem:[%s4] sm:$0xf]
    %v185 = vlaneseq
    %v186 = vshrl.u32 %v185, 7
    %v187 = vsub.s32 0, %v186
    %v188 = vrot.slane %v183, %v187
    %v189 = vlaneseq
    %v190 = vshrl.u32 %v189, 7
    %v191 = vsub.s32 1, %v190
    %v192 = vrot.slane %v183, %v191
    %v193 = vlaneseq
    %v194 = vshrl.u32 %v193, 7
    %v195 = vsub.s32 2, %v194
    %v196 = vrot.slane %v183, %v195
    %v197 = vlaneseq
    %v198 = vshrl.u32 %v197, 7
    %v199 = vsub.s32 3, %v198
    %v200 = vrot.slane %v183, %v199
    %v237 = vunpack.c.l.b16 %v150
    %v238 = vunpack.c.h.b16 %v150
    %v239 = vunpack.c.l.b16 %v151
    %v240 = vunpack.c.h.b16 %v151
    %v241 = vunpack.c.l.b16 %v152
    %v242 = vunpack.c.h.b16 %v152
    %v243 = vunpack.c.l.b16 %v153
    %v244 = vunpack.c.h.b16 %v153
    %v245 = vunpack.c.l.b16 %v154
    %v246 = vunpack.c.h.b16 %v154
    %v247 = vunpack.c.l.b16 %v155
    %v248 = vunpack.c.h.b16 %v155
    %v249 = vunpack.c.l.b16 %v156
    %v250 = vunpack.c.h.b16 %v156
    %v251 = vunpack.c.l.b16 %v157
    %v252 = vunpack.c.h.b16 %v157
    %v253 = vunpack.c.l.b16 %v158
    %v254 = vunpack.c.h.b16 %v158
    %v255 = vunpack.c.l.b16 %v159
    %v256 = vunpack.c.h.b16 %v159
    %v257 = vunpack.c.l.b16 %v160
    %v258 = vunpack.c.h.b16 %v160
    %v259 = vunpack.c.l.b16 %v161
    %v260 = vunpack.c.h.b16 %v161
    %v261 = vunpack.c.l.b16 %v162
    %v262 = vunpack.c.h.b16 %v162
    %v263 = vunpack.c.l.b16 %v163
    %v264 = vunpack.c.h.b16 %v163
    %v265 = vunpack.c.l.b16 %v164
    %v266 = vunpack.c.h.b16 %v164
    %v267 = vunpack.c.l.b16 %v165
    %v268 = vunpack.c.h.b16 %v165
    %v269 = vunpack.c.l.b16 %v166
    %v270 = vunpack.c.h.b16 %v166
    %v271 = vunpack.c.l.b16 %v167
    %v272 = vunpack.c.h.b16 %v167
    %v273 = vunpack.c.l.b16 %v168
    %v274 = vunpack.c.h.b16 %v168
    %v275 = vunpack.c.l.b16 %v169
    %v276 = vunpack.c.h.b16 %v169
    %v277 = vunpack.c.l.b16 %v170
    %v278 = vunpack.c.h.b16 %v170
    %v279 = vunpack.c.l.b16 %v171
    %v280 = vunpack.c.h.b16 %v171
    %v281 = vunpack.c.l.b16 %v172
    %v282 = vunpack.c.h.b16 %v172
    %v283 = vunpack.c.l.b16 %v173
    %v284 = vunpack.c.h.b16 %v173
    %v285 = vunpack.c.l.b16 %v174
    %v286 = vunpack.c.h.b16 %v174
    %v287 = vunpack.c.l.b16 %v175
    %v288 = vunpack.c.h.b16 %v175
    %v289 = vunpack.c.l.b16 %v176
    %v290 = vunpack.c.h.b16 %v176
    %v291 = vunpack.c.l.b16 %v177
    %v292 = vunpack.c.h.b16 %v177
    %v293 = vunpack.c.l.b16 %v178
    %v294 = vunpack.c.h.b16 %v178
    %v295 = vunpack.c.l.b16 %v179
    %v296 = vunpack.c.h.b16 %v179
    %v297 = vunpack.c.l.b16 %v180
    %v298 = vunpack.c.h.b16 %v180
    %v299 = vunpack.c.l.b16 %v181
    %v300 = vunpack.c.h.b16 %v181
    %v301 = vpack.c.b16 %v241, %v237
    %v302 = vpack.c.b16 %v242, %v238
    %v303 = vpack.c.b16 %v243, %v239
    %v304 = vpack.c.b16 %v244, %v240
    %v305 = vpack.c.b16 %v249, %v245
    %v306 = vpack.c.b16 %v250, %v246
    %v307 = vpack.c.b16 %v251, %v247
    %v308 = vpack.c.b16 %v252, %v248
    %v309 = vpack.c.b16 %v257, %v253
    %v310 = vpack.c.b16 %v258, %v254
    %v311 = vpack.c.b16 %v259, %v255
    %v312 = vpack.c.b16 %v260, %v256
    %v313 = vpack.c.b16 %v265, %v261
    %v314 = vpack.c.b16 %v266, %v262
    %v315 = vpack.c.b16 %v267, %v263
    %v316 = vpack.c.b16 %v268, %v264
    %v317 = vpack.c.b16 %v273, %v269
    %v318 = vpack.c.b16 %v274, %v270
    %v319 = vpack.c.b16 %v275, %v271
    %v320 = vpack.c.b16 %v276, %v272
    %v321 = vpack.c.b16 %v281, %v277
    %v322 = vpack.c.b16 %v282, %v278
    %v323 = vpack.c.b16 %v283, %v279
    %v324 = vpack.c.b16 %v284, %v280
    %v325 = vpack.c.b16 %v289, %v285
    %v326 = vpack.c.b16 %v290, %v286
    %v327 = vpack.c.b16 %v291, %v287
    %v328 = vpack.c.b16 %v292, %v288
    %v329 = vpack.c.b16 %v297, %v293
    %v330 = vpack.c.b16 %v298, %v294
    %v331 = vpack.c.b16 %v299, %v295
    %v332 = vpack.c.b16 %v300, %v296
    %365 = vmatprep.subr.bf16.mxu0 %v330
    %366 = vmatpush1.bf16.msra.mxu0 %v329
    %367 = vmatprep.subr.bf16.mxu0 %v326
    %368 = vmatpush1.bf16.msra.mxu0 %v325
    %369 = vmatprep.subr.bf16.mxu0 %v322
    %370 = vmatpush1.bf16.msra.mxu0 %v321
    %371 = vmatprep.subr.bf16.mxu0 %v318
    %372 = vmatpush1.bf16.msra.mxu0 %v317
    %373 = vmatprep.subr.bf16.mxu0 %v314
    %374 = vmatpush1.bf16.msra.mxu0 %v313
    %375 = vmatprep.subr.bf16.mxu0 %v310
    %376 = vmatpush1.bf16.msra.mxu0 %v309
    %377 = vmatprep.subr.bf16.mxu0 %v306
    %378 = vmatpush1.bf16.msra.mxu0 %v305
    %379 = vmatprep.subr.bf16.mxu0 %v302
    %380 = vmatpush1.bf16.msra.mxu0 %v301
    %381 = vmatprep.subr.bf16.mxu0 0
    %382 = vmatpush2.bf16.msra.mxu0 0
    %383 = vmatprep.subr.bf16.mxu0 0
    %384 = vmatpush2.bf16.msra.mxu0 0
    %385 = vmatprep.subr.bf16.mxu0 0
    %386 = vmatpush2.bf16.msra.mxu0 0
    %387 = vmatprep.subr.bf16.mxu0 0
    %388 = vmatpush2.bf16.msra.mxu0 0
    %389 = vmatprep.subr.bf16.mxu0 0
    %390 = vmatpush2.bf16.msra.mxu0 0
    %391 = vmatprep.subr.bf16.mxu0 0
    %392 = vmatpush2.bf16.msra.mxu0 0
    %393 = vmatprep.subr.bf16.mxu0 0
    %394 = vmatpush2.bf16.msra.mxu0 0
    %395 = vmatprep.subr.bf16.mxu0 0
    %396 = vmatpush2.bf16.msra.mxu0 0
    %397 = vmatprep.mubr.bf16.mxu0 0
    %398 = vmatmul.mubr.bf16.gmra.mxu0 %v182
    %v399 = vpop.f32.mrf.mxu0
    %v400 = vadd.f32 %v188, %v399
    %v401 = vpop.f32.mrf.mxu0
    %v402 = vadd.f32 %v192, %v401
    %v403 = vpop.f32.mrf.mxu0
    %v404 = vpop.f32.mrf.mxu0
    %405 = vdwg.mxu0
    %406 = vmatprep.subr.bf16.mxu0 %v332
    %407 = vmatpush1.bf16.msra.mxu0 %v331
    %408 = vmatprep.subr.bf16.mxu0 %v328
    %409 = vmatpush1.bf16.msra.mxu0 %v327
    %410 = vmatprep.subr.bf16.mxu0 %v324
    %411 = vmatpush1.bf16.msra.mxu0 %v323
    %412 = vmatprep.subr.bf16.mxu0 %v320
    %413 = vmatpush1.bf16.msra.mxu0 %v319
    %414 = vmatprep.subr.bf16.mxu0 %v316
    %415 = vmatpush1.bf16.msra.mxu0 %v315
    %416 = vmatprep.subr.bf16.mxu0 %v312
    %417 = vmatpush1.bf16.msra.mxu0 %v311
    %418 = vmatprep.subr.bf16.mxu0 %v308
    %419 = vmatpush1.bf16.msra.mxu0 %v307
    %420 = vmatprep.subr.bf16.mxu0 %v304
    %421 = vmatpush1.bf16.msra.mxu0 %v303
    %422 = vmatprep.subr.bf16.mxu0 0
    %423 = vmatpush2.bf16.msra.mxu0 0
    %424 = vmatprep.subr.bf16.mxu0 0
    %425 = vmatpush2.bf16.msra.mxu0 0
    %426 = vmatprep.subr.bf16.mxu0 0
    %427 = vmatpush2.bf16.msra.mxu0 0
    %428 = vmatprep.subr.bf16.mxu0 0
    %429 = vmatpush2.bf16.msra.mxu0 0
    %430 = vmatprep.subr.bf16.mxu0 0
    %431 = vmatpush2.bf16.msra.mxu0 0
    %432 = vmatprep.subr.bf16.mxu0 0
    %433 = vmatpush2.bf16.msra.mxu0 0
    %434 = vmatprep.subr.bf16.mxu0 0
    %435 = vmatpush2.bf16.msra.mxu0 0
    %436 = vmatprep.subr.bf16.mxu0 0
    %437 = vmatpush2.bf16.msra.mxu0 0
    %438 = vmatprep.mubr.bf16.mxu0 0
    %439 = vmatmul.mubr.bf16.gmra.mxu0 %v182
    %v440 = vpop.f32.mrf.mxu0
    %v441 = vadd.f32 %v196, %v440
    %v442 = vpop.f32.mrf.mxu0
    %v443 = vadd.f32 %v200, %v442
    %v444 = vpop.f32.mrf.mxu0
    %v445 = vpop.f32.mrf.mxu0
    %446 = vdwg.mxu0
    %v447 = vxor.u32 %v400, 2147483648
    %v448 = vxor.u32 %v402, 2147483648
    %v449 = vxor.u32 %v441, 2147483648
    %v450 = vxor.u32 %v443, 2147483648
    %v451 = vmul.f32 %v447, 1.442695
    %v452 = vpow.pop %v451
    %v453 = vmul.f32 %v448, 1.442695
    %v454 = vpow.pop %v453
    %v455 = vmul.f32 %v449, 1.442695
    %v456 = vpow.pop %v455
    %v457 = vmul.f32 %v450, 1.442695
    %v458 = vpow.pop %v457
    %v459 = vadd.f32 %v452, 1.0
    %v460 = vadd.f32 %v454, 1.0
    %v461 = vadd.f32 %v456, 1.0
    %v462 = vadd.f32 %v458, 1.0
    %v463 = vrcp.pop %v459
    %v464 = vmul.f32 1.0, %v463
    %v465 = vrcp.pop %v460
    %v466 = vmul.f32 1.0, %v465
    %v467 = vrcp.pop %v461
    %v468 = vmul.f32 1.0, %v467
    %v469 = vrcp.pop %v462
    %v470 = vmul.f32 1.0, %v469
    %v471 = vmul.f32 %v400, %v464
    %v472 = vmul.f32 %v402, %v466
    %v473 = vmul.f32 %v441, %v468
    %v474 = vmul.f32 %v443, %v470
    %v475 = vld [vmem:[#allocation4] sm:$0xff]
    %v476 = vld [vmem:[#allocation4 + $0x8] sm:$0xff]
    %v477 = vld [vmem:[#allocation4 + $0x10] sm:$0xff]
    %v478 = vld [vmem:[#allocation4 + $0x18] sm:$0xff]
    %v479 = vld [vmem:[#allocation4 + $0x20] sm:$0xff]
    %v480 = vld [vmem:[#allocation4 + $0x28] sm:$0xff]
    %v481 = vld [vmem:[#allocation4 + $0x30] sm:$0xff]
    %v482 = vld [vmem:[#allocation4 + $0x38] sm:$0xff]
    %v483 = vld [vmem:[#allocation4 + $0x40] sm:$0xff]
    %v484 = vld [vmem:[#allocation4 + $0x48] sm:$0xff]
    %v485 = vld [vmem:[#allocation4 + $0x50] sm:$0xff]
    %v486 = vld [vmem:[#allocation4 + $0x58] sm:$0xff]
    %v487 = vld [vmem:[#allocation4 + $0x60] sm:$0xff]
    %v488 = vld [vmem:[#allocation4 + $0x68] sm:$0xff]
    %v489 = vld [vmem:[#allocation4 + $0x70] sm:$0xff]
    %v490 = vld [vmem:[#allocation4 + $0x78] sm:$0xff]
    %v491 = vld [vmem:[#allocation4 + $0x80] sm:$0xff]
    %v492 = vld [vmem:[#allocation4 + $0x88] sm:$0xff]
    %v493 = vld [vmem:[#allocation4 + $0x90] sm:$0xff]
    %v494 = vld [vmem:[#allocation4 + $0x98] sm:$0xff]
    %v495 = vld [vmem:[#allocation4 + $0xa0] sm:$0xff]
    %v496 = vld [vmem:[#allocation4 + $0xa8] sm:$0xff]
    %v497 = vld [vmem:[#allocation4 + $0xb0] sm:$0xff]
    %v498 = vld [vmem:[#allocation4 + $0xb8] sm:$0xff]
    %v499 = vld [vmem:[#allocation4 + $0xc0] sm:$0xff]
    %v500 = vld [vmem:[#allocation4 + $0xc8] sm:$0xff]
    %v501 = vld [vmem:[#allocation4 + $0xd0] sm:$0xff]
    %v502 = vld [vmem:[#allocation4 + $0xd8] sm:$0xff]
    %v503 = vld [vmem:[#allocation4 + $0xe0] sm:$0xff]
    %v504 = vld [vmem:[#allocation4 + $0xe8] sm:$0xff]
    %v505 = vld [vmem:[#allocation4 + $0xf0] sm:$0xff]
    %v506 = vld [vmem:[#allocation4 + $0xf8] sm:$0xff]
    %v507 = vld [vmem:[#allocation4 + $0x100] sm:$0xff]
    %v508 = vld [vmem:[#allocation4 + $0x108] sm:$0xff]
    %v509 = vld [vmem:[#allocation4 + $0x110] sm:$0xff]
    %v510 = vld [vmem:[#allocation4 + $0x118] sm:$0xff]
    %v511 = vld [vmem:[#allocation4 + $0x120] sm:$0xff]
    %v512 = vld [vmem:[#allocation4 + $0x128] sm:$0xff]
    %v513 = vld [vmem:[#allocation4 + $0x130] sm:$0xff]
    %v514 = vld [vmem:[#allocation4 + $0x138] sm:$0xff]
    %v515 = vld [vmem:[#allocation4 + $0x140] sm:$0xff]
    %v516 = vld [vmem:[#allocation4 + $0x148] sm:$0xff]
    %v517 = vld [vmem:[#allocation4 + $0x150] sm:$0xff]
    %v518 = vld [vmem:[#allocation4 + $0x158] sm:$0xff]
    %v519 = vld [vmem:[#allocation4 + $0x160] sm:$0xff]
    %v520 = vld [vmem:[#allocation4 + $0x168] sm:$0xff]
    %v521 = vld [vmem:[#allocation4 + $0x170] sm:$0xff]
    %v522 = vld [vmem:[#allocation4 + $0x178] sm:$0xff]
    %v523 = vld [vmem:[#allocation4 + $0x180] sm:$0xff]
    %v524 = vld [vmem:[#allocation4 + $0x188] sm:$0xff]
    %v525 = vld [vmem:[#allocation4 + $0x190] sm:$0xff]
    %v526 = vld [vmem:[#allocation4 + $0x198] sm:$0xff]
    %v527 = vld [vmem:[#allocation4 + $0x1a0] sm:$0xff]
    %v528 = vld [vmem:[#allocation4 + $0x1a8] sm:$0xff]
    %v529 = vld [vmem:[#allocation4 + $0x1b0] sm:$0xff]
    %v530 = vld [vmem:[#allocation4 + $0x1b8] sm:$0xff]
    %v531 = vld [vmem:[#allocation4 + $0x1c0] sm:$0xff]
    %v532 = vld [vmem:[#allocation4 + $0x1c8] sm:$0xff]
    %v533 = vld [vmem:[#allocation4 + $0x1d0] sm:$0xff]
    %v534 = vld [vmem:[#allocation4 + $0x1d8] sm:$0xff]
    %v535 = vld [vmem:[#allocation4 + $0x1e0] sm:$0xff]
    %v536 = vld [vmem:[#allocation4 + $0x1e8] sm:$0xff]
    %v537 = vld [vmem:[#allocation4 + $0x1f0] sm:$0xff]
    %v538 = vld [vmem:[#allocation4 + $0x1f8] sm:$0xff]
    %v539 = vld [vmem:[#allocation4 + $0x200] sm:$0xff]
    %v540 = vld [vmem:[#allocation4 + $0x208] sm:$0xff]
    %v541 = vld [vmem:[#allocation4 + $0x210] sm:$0xff]
    %v542 = vld [vmem:[#allocation4 + $0x218] sm:$0xff]
    %v543 = vld [vmem:[#allocation4 + $0x220] sm:$0xff]
    %v544 = vld [vmem:[#allocation4 + $0x228] sm:$0xff]
    %v545 = vld [vmem:[#allocation4 + $0x230] sm:$0xff]
    %v546 = vld [vmem:[#allocation4 + $0x238] sm:$0xff]
    %v547 = vld [vmem:[#allocation4 + $0x240] sm:$0xff]
    %v548 = vld [vmem:[#allocation4 + $0x248] sm:$0xff]
    %v549 = vld [vmem:[#allocation4 + $0x250] sm:$0xff]
    %v550 = vld [vmem:[#allocation4 + $0x258] sm:$0xff]
    %v551 = vld [vmem:[#allocation4 + $0x260] sm:$0xff]
    %v552 = vld [vmem:[#allocation4 + $0x268] sm:$0xff]
    %v553 = vld [vmem:[#allocation4 + $0x270] sm:$0xff]
    %v554 = vld [vmem:[#allocation4 + $0x278] sm:$0xff]
    %v555 = vld [vmem:[#allocation4 + $0x280] sm:$0xff]
    %v556 = vld [vmem:[#allocation4 + $0x288] sm:$0xff]
    %v557 = vld [vmem:[#allocation4 + $0x290] sm:$0xff]
    %v558 = vld [vmem:[#allocation4 + $0x298] sm:$0xff]
    %v559 = vld [vmem:[#allocation4 + $0x2a0] sm:$0xff]
    %v560 = vld [vmem:[#allocation4 + $0x2a8] sm:$0xff]
    %v561 = vld [vmem:[#allocation4 + $0x2b0] sm:$0xff]
    %v562 = vld [vmem:[#allocation4 + $0x2b8] sm:$0xff]
    %v563 = vld [vmem:[#allocation4 + $0x2c0] sm:$0xff]
    %v564 = vld [vmem:[#allocation4 + $0x2c8] sm:$0xff]
    %v565 = vld [vmem:[#allocation4 + $0x2d0] sm:$0xff]
    %v566 = vld [vmem:[#allocation4 + $0x2d8] sm:$0xff]
    %v567 = vld [vmem:[#allocation4 + $0x2e0] sm:$0xff]
    %v568 = vld [vmem:[#allocation4 + $0x2e8] sm:$0xff]
    %v569 = vld [vmem:[#allocation4 + $0x2f0] sm:$0xff]
    %v570 = vld [vmem:[#allocation4 + $0x2f8] sm:$0xff]
    %v571 = vld [vmem:[#allocation4 + $0x300] sm:$0xff]
    %v572 = vld [vmem:[#allocation4 + $0x308] sm:$0xff]
    %v573 = vld [vmem:[#allocation4 + $0x310] sm:$0xff]
    %v574 = vld [vmem:[#allocation4 + $0x318] sm:$0xff]
    %v575 = vld [vmem:[#allocation4 + $0x320] sm:$0xff]
    %v576 = vld [vmem:[#allocation4 + $0x328] sm:$0xff]
    %v577 = vld [vmem:[#allocation4 + $0x330] sm:$0xff]
    %v578 = vld [vmem:[#allocation4 + $0x338] sm:$0xff]
    %v579 = vld [vmem:[#allocation4 + $0x340] sm:$0xff]
    %v580 = vld [vmem:[#allocation4 + $0x348] sm:$0xff]
    %v581 = vld [vmem:[#allocation4 + $0x350] sm:$0xff]
    %v582 = vld [vmem:[#allocation4 + $0x358] sm:$0xff]
    %v583 = vld [vmem:[#allocation4 + $0x360] sm:$0xff]
    %v584 = vld [vmem:[#allocation4 + $0x368] sm:$0xff]
    %v585 = vld [vmem:[#allocation4 + $0x370] sm:$0xff]
    %v586 = vld [vmem:[#allocation4 + $0x378] sm:$0xff]
    %v587 = vld [vmem:[#allocation4 + $0x380] sm:$0xff]
    %v588 = vld [vmem:[#allocation4 + $0x388] sm:$0xff]
    %v589 = vld [vmem:[#allocation4 + $0x390] sm:$0xff]
    %v590 = vld [vmem:[#allocation4 + $0x398] sm:$0xff]
    %v591 = vld [vmem:[#allocation4 + $0x3a0] sm:$0xff]
    %v592 = vld [vmem:[#allocation4 + $0x3a8] sm:$0xff]
    %v593 = vld [vmem:[#allocation4 + $0x3b0] sm:$0xff]
    %v594 = vld [vmem:[#allocation4 + $0x3b8] sm:$0xff]
    %v595 = vld [vmem:[#allocation4 + $0x3c0] sm:$0xff]
    %v596 = vld [vmem:[#allocation4 + $0x3c8] sm:$0xff]
    %v597 = vld [vmem:[#allocation4 + $0x3d0] sm:$0xff]
    %v598 = vld [vmem:[#allocation4 + $0x3d8] sm:$0xff]
    %v599 = vld [vmem:[#allocation4 + $0x3e0] sm:$0xff]
    %v600 = vld [vmem:[#allocation4 + $0x3e8] sm:$0xff]
    %v601 = vld [vmem:[#allocation4 + $0x3f0] sm:$0xff]
    %v602 = vld [vmem:[#allocation4 + $0x3f8] sm:$0xff]
    %v603 = vpack.c.bf16 %v471, %v471
    %v604 = vpack.c.bf16 %v472, %v472
    %v605 = vpack.c.bf16 %v473, %v473
    %v606 = vpack.c.bf16 %v474, %v474
    %v607 = vld [vmem:[%s6] sm:$0xf]
    %v609 = vlaneseq
    %v610 = vshrl.u32 %v609, 7
    %v611 = vsub.s32 0, %v610
    %v612 = vrot.slane %v607, %v611
    %v613 = vlaneseq
    %v614 = vshrl.u32 %v613, 7
    %v615 = vsub.s32 1, %v614
    %v616 = vrot.slane %v607, %v615
    %v617 = vlaneseq
    %v618 = vshrl.u32 %v617, 7
    %v619 = vsub.s32 2, %v618
    %v620 = vrot.slane %v607, %v619
    %v621 = vlaneseq
    %v622 = vshrl.u32 %v621, 7
    %v623 = vsub.s32 3, %v622
    %v624 = vrot.slane %v607, %v623
    %v757 = vunpack.c.l.b16 %v475
    %v758 = vunpack.c.h.b16 %v475
    %v759 = vunpack.c.l.b16 %v476
    %v760 = vunpack.c.h.b16 %v476
    %v761 = vunpack.c.l.b16 %v477
    %v762 = vunpack.c.h.b16 %v477
    %v763 = vunpack.c.l.b16 %v478
    %v764 = vunpack.c.h.b16 %v478
    %v765 = vunpack.c.l.b16 %v479
    %v766 = vunpack.c.h.b16 %v479
    %v767 = vunpack.c.l.b16 %v480
    %v768 = vunpack.c.h.b16 %v480
    %v769 = vunpack.c.l.b16 %v481
    %v770 = vunpack.c.h.b16 %v481
    %v771 = vunpack.c.l.b16 %v482
    %v772 = vunpack.c.h.b16 %v482
    %v773 = vunpack.c.l.b16 %v483
    %v774 = vunpack.c.h.b16 %v483
    %v775 = vunpack.c.l.b16 %v484
    %v776 = vunpack.c.h.b16 %v484
    %v777 = vunpack.c.l.b16 %v485
    %v778 = vunpack.c.h.b16 %v485
    %v779 = vunpack.c.l.b16 %v486
    %v780 = vunpack.c.h.b16 %v486
    %v781 = vunpack.c.l.b16 %v487
    %v782 = vunpack.c.h.b16 %v487
    %v783 = vunpack.c.l.b16 %v488
    %v784 = vunpack.c.h.b16 %v488
    %v785 = vunpack.c.l.b16 %v489
    %v786 = vunpack.c.h.b16 %v489
    %v787 = vunpack.c.l.b16 %v490
    %v788 = vunpack.c.h.b16 %v490
    %v789 = vunpack.c.l.b16 %v491
    %v790 = vunpack.c.h.b16 %v491
    %v791 = vunpack.c.l.b16 %v492
    %v792 = vunpack.c.h.b16 %v492
    %v793 = vunpack.c.l.b16 %v493
    %v794 = vunpack.c.h.b16 %v493
    %v795 = vunpack.c.l.b16 %v494
    %v796 = vunpack.c.h.b16 %v494
    %v797 = vunpack.c.l.b16 %v495
    %v798 = vunpack.c.h.b16 %v495
    %v799 = vunpack.c.l.b16 %v496
    %v800 = vunpack.c.h.b16 %v496
    %v801 = vunpack.c.l.b16 %v497
    %v802 = vunpack.c.h.b16 %v497
    %v803 = vunpack.c.l.b16 %v498
    %v804 = vunpack.c.h.b16 %v498
    %v805 = vunpack.c.l.b16 %v499
    %v806 = vunpack.c.h.b16 %v499
    %v807 = vunpack.c.l.b16 %v500
    %v808 = vunpack.c.h.b16 %v500
    %v809 = vunpack.c.l.b16 %v501
    %v810 = vunpack.c.h.b16 %v501
    %v811 = vunpack.c.l.b16 %v502
    %v812 = vunpack.c.h.b16 %v502
    %v813 = vunpack.c.l.b16 %v503
    %v814 = vunpack.c.h.b16 %v503
    %v815 = vunpack.c.l.b16 %v504
    %v816 = vunpack.c.h.b16 %v504
    %v817 = vunpack.c.l.b16 %v505
    %v818 = vunpack.c.h.b16 %v505
    %v819 = vunpack.c.l.b16 %v506
    %v820 = vunpack.c.h.b16 %v506
    %v821 = vunpack.c.l.b16 %v507
    %v822 = vunpack.c.h.b16 %v507
    %v823 = vunpack.c.l.b16 %v508
    %v824 = vunpack.c.h.b16 %v508
    %v825 = vunpack.c.l.b16 %v509
    %v826 = vunpack.c.h.b16 %v509
    %v827 = vunpack.c.l.b16 %v510
    %v828 = vunpack.c.h.b16 %v510
    %v829 = vunpack.c.l.b16 %v511
    %v830 = vunpack.c.h.b16 %v511
    %v831 = vunpack.c.l.b16 %v512
    %v832 = vunpack.c.h.b16 %v512
    %v833 = vunpack.c.l.b16 %v513
    %v834 = vunpack.c.h.b16 %v513
    %v835 = vunpack.c.l.b16 %v514
    %v836 = vunpack.c.h.b16 %v514
    %v837 = vunpack.c.l.b16 %v515
    %v838 = vunpack.c.h.b16 %v515
    %v839 = vunpack.c.l.b16 %v516
    %v840 = vunpack.c.h.b16 %v516
    %v841 = vunpack.c.l.b16 %v517
    %v842 = vunpack.c.h.b16 %v517
    %v843 = vunpack.c.l.b16 %v518
    %v844 = vunpack.c.h.b16 %v518
    %v845 = vunpack.c.l.b16 %v519
    %v846 = vunpack.c.h.b16 %v519
    %v847 = vunpack.c.l.b16 %v520
    %v848 = vunpack.c.h.b16 %v520
    %v849 = vunpack.c.l.b16 %v521
    %v850 = vunpack.c.h.b16 %v521
    %v851 = vunpack.c.l.b16 %v522
    %v852 = vunpack.c.h.b16 %v522
    %v853 = vunpack.c.l.b16 %v523
    %v854 = vunpack.c.h.b16 %v523
    %v855 = vunpack.c.l.b16 %v524
    %v856 = vunpack.c.h.b16 %v524
    %v857 = vunpack.c.l.b16 %v525
    %v858 = vunpack.c.h.b16 %v525
    %v859 = vunpack.c.l.b16 %v526
    %v860 = vunpack.c.h.b16 %v526
    %v861 = vunpack.c.l.b16 %v527
    %v862 = vunpack.c.h.b16 %v527
    %v863 = vunpack.c.l.b16 %v528
    %v864 = vunpack.c.h.b16 %v528
    %v865 = vunpack.c.l.b16 %v529
    %v866 = vunpack.c.h.b16 %v529
    %v867 = vunpack.c.l.b16 %v530
    %v868 = vunpack.c.h.b16 %v530
    %v869 = vunpack.c.l.b16 %v531
    %v870 = vunpack.c.h.b16 %v531
    %v871 = vunpack.c.l.b16 %v532
    %v872 = vunpack.c.h.b16 %v532
    %v873 = vunpack.c.l.b16 %v533
    %v874 = vunpack.c.h.b16 %v533
    %v875 = vunpack.c.l.b16 %v534
    %v876 = vunpack.c.h.b16 %v534
    %v877 = vunpack.c.l.b16 %v535
    %v878 = vunpack.c.h.b16 %v535
    %v879 = vunpack.c.l.b16 %v536
    %v880 = vunpack.c.h.b16 %v536
    %v881 = vunpack.c.l.b16 %v537
    %v882 = vunpack.c.h.b16 %v537
    %v883 = vunpack.c.l.b16 %v538
    %v884 = vunpack.c.h.b16 %v538
    %v885 = vunpack.c.l.b16 %v539
    %v886 = vunpack.c.h.b16 %v539
    %v887 = vunpack.c.l.b16 %v540
    %v888 = vunpack.c.h.b16 %v540
    %v889 = vunpack.c.l.b16 %v541
    %v890 = vunpack.c.h.b16 %v541
    %v891 = vunpack.c.l.b16 %v542
    %v892 = vunpack.c.h.b16 %v542
    %v893 = vunpack.c.l.b16 %v543
    %v894 = vunpack.c.h.b16 %v543
    %v895 = vunpack.c.l.b16 %v544
    %v896 = vunpack.c.h.b16 %v544
    %v897 = vunpack.c.l.b16 %v545
    %v898 = vunpack.c.h.b16 %v545
    %v899 = vunpack.c.l.b16 %v546
    %v900 = vunpack.c.h.b16 %v546
    %v901 = vunpack.c.l.b16 %v547
    %v902 = vunpack.c.h.b16 %v547
    %v903 = vunpack.c.l.b16 %v548
    %v904 = vunpack.c.h.b16 %v548
    %v905 = vunpack.c.l.b16 %v549
    %v906 = vunpack.c.h.b16 %v549
    %v907 = vunpack.c.l.b16 %v550
    %v908 = vunpack.c.h.b16 %v550
    %v909 = vunpack.c.l.b16 %v551
    %v910 = vunpack.c.h.b16 %v551
    %v911 = vunpack.c.l.b16 %v552
    %v912 = vunpack.c.h.b16 %v552
    %v913 = vunpack.c.l.b16 %v553
    %v914 = vunpack.c.h.b16 %v553
    %v915 = vunpack.c.l.b16 %v554
    %v916 = vunpack.c.h.b16 %v554
    %v917 = vunpack.c.l.b16 %v555
    %v918 = vunpack.c.h.b16 %v555
    %v919 = vunpack.c.l.b16 %v556
    %v920 = vunpack.c.h.b16 %v556
    %v921 = vunpack.c.l.b16 %v557
    %v922 = vunpack.c.h.b16 %v557
    %v923 = vunpack.c.l.b16 %v558
    %v924 = vunpack.c.h.b16 %v558
    %v925 = vunpack.c.l.b16 %v559
    %v926 = vunpack.c.h.b16 %v559
    %v927 = vunpack.c.l.b16 %v560
    %v928 = vunpack.c.h.b16 %v560
    %v929 = vunpack.c.l.b16 %v561
    %v930 = vunpack.c.h.b16 %v561
    %v931 = vunpack.c.l.b16 %v562
    %v932 = vunpack.c.h.b16 %v562
    %v933 = vunpack.c.l.b16 %v563
    %v934 = vunpack.c.h.b16 %v563
    %v935 = vunpack.c.l.b16 %v564
    %v936 = vunpack.c.h.b16 %v564
    %v937 = vunpack.c.l.b16 %v565
    %v938 = vunpack.c.h.b16 %v565
    %v939 = vunpack.c.l.b16 %v566
    %v940 = vunpack.c.h.b16 %v566
    %v941 = vunpack.c.l.b16 %v567
    %v942 = vunpack.c.h.b16 %v567
    %v943 = vunpack.c.l.b16 %v568
    %v944 = vunpack.c.h.b16 %v568
    %v945 = vunpack.c.l.b16 %v569
    %v946 = vunpack.c.h.b16 %v569
    %v947 = vunpack.c.l.b16 %v570
    %v948 = vunpack.c.h.b16 %v570
    %v949 = vunpack.c.l.b16 %v571
    %v950 = vunpack.c.h.b16 %v571
    %v951 = vunpack.c.l.b16 %v572
    %v952 = vunpack.c.h.b16 %v572
    %v953 = vunpack.c.l.b16 %v573
    %v954 = vunpack.c.h.b16 %v573
    %v955 = vunpack.c.l.b16 %v574
    %v956 = vunpack.c.h.b16 %v574
    %v957 = vunpack.c.l.b16 %v575
    %v958 = vunpack.c.h.b16 %v575
    %v959 = vunpack.c.l.b16 %v576
    %v960 = vunpack.c.h.b16 %v576
    %v961 = vunpack.c.l.b16 %v577
    %v962 = vunpack.c.h.b16 %v577
    %v963 = vunpack.c.l.b16 %v578
    %v964 = vunpack.c.h.b16 %v578
    %v965 = vunpack.c.l.b16 %v579
    %v966 = vunpack.c.h.b16 %v579
    %v967 = vunpack.c.l.b16 %v580
    %v968 = vunpack.c.h.b16 %v580
    %v969 = vunpack.c.l.b16 %v581
    %v970 = vunpack.c.h.b16 %v581
    %v971 = vunpack.c.l.b16 %v582
    %v972 = vunpack.c.h.b16 %v582
    %v973 = vunpack.c.l.b16 %v583
    %v974 = vunpack.c.h.b16 %v583
    %v975 = vunpack.c.l.b16 %v584
    %v976 = vunpack.c.h.b16 %v584
    %v977 = vunpack.c.l.b16 %v585
    %v978 = vunpack.c.h.b16 %v585
    %v979 = vunpack.c.l.b16 %v586
    %v980 = vunpack.c.h.b16 %v586
    %v981 = vunpack.c.l.b16 %v587
    %v982 = vunpack.c.h.b16 %v587
    %v983 = vunpack.c.l.b16 %v588
    %v984 = vunpack.c.h.b16 %v588
    %v985 = vunpack.c.l.b16 %v589
    %v986 = vunpack.c.h.b16 %v589
    %v987 = vunpack.c.l.b16 %v590
    %v988 = vunpack.c.h.b16 %v590
    %v989 = vunpack.c.l.b16 %v591
    %v990 = vunpack.c.h.b16 %v591
    %v991 = vunpack.c.l.b16 %v592
    %v992 = vunpack.c.h.b16 %v592
    %v993 = vunpack.c.l.b16 %v593
    %v994 = vunpack.c.h.b16 %v593
    %v995 = vunpack.c.l.b16 %v594
    %v996 = vunpack.c.h.b16 %v594
    %v997 = vunpack.c.l.b16 %v595
    %v998 = vunpack.c.h.b16 %v595
    %v999 = vunpack.c.l.b16 %v596
    %v1000 = vunpack.c.h.b16 %v596
    %v1001 = vunpack.c.l.b16 %v597
    %v1002 = vunpack.c.h.b16 %v597
    %v1003 = vunpack.c.l.b16 %v598
    %v1004 = vunpack.c.h.b16 %v598
    %v1005 = vunpack.c.l.b16 %v599
    %v1006 = vunpack.c.h.b16 %v599
    %v1007 = vunpack.c.l.b16 %v600
    %v1008 = vunpack.c.h.b16 %v600
    %v1009 = vunpack.c.l.b16 %v601
    %v1010 = vunpack.c.h.b16 %v601
    %v1011 = vunpack.c.l.b16 %v602
    %v1012 = vunpack.c.h.b16 %v602
    %v1013 = vpack.c.b16 %v761, %v757
    %v1014 = vpack.c.b16 %v762, %v758
    %v1015 = vpack.c.b16 %v763, %v759
    %v1016 = vpack.c.b16 %v764, %v760
    %v1017 = vpack.c.b16 %v769, %v765
    %v1018 = vpack.c.b16 %v770, %v766
    %v1019 = vpack.c.b16 %v771, %v767
    %v1020 = vpack.c.b16 %v772, %v768
    %v1021 = vpack.c.b16 %v777, %v773
    %v1022 = vpack.c.b16 %v778, %v774
    %v1023 = vpack.c.b16 %v779, %v775
    %v1024 = vpack.c.b16 %v780, %v776
    %v1025 = vpack.c.b16 %v785, %v781
    %v1026 = vpack.c.b16 %v786, %v782
    %v1027 = vpack.c.b16 %v787, %v783
    %v1028 = vpack.c.b16 %v788, %v784
    %v1029 = vpack.c.b16 %v793, %v789
    %v1030 = vpack.c.b16 %v794, %v790
    %v1031 = vpack.c.b16 %v795, %v791
    %v1032 = vpack.c.b16 %v796, %v792
    %v1033 = vpack.c.b16 %v801, %v797
    %v1034 = vpack.c.b16 %v802, %v798
    %v1035 = vpack.c.b16 %v803, %v799
    %v1036 = vpack.c.b16 %v804, %v800
    %v1037 = vpack.c.b16 %v809, %v805
    %v1038 = vpack.c.b16 %v810, %v806
    %v1039 = vpack.c.b16 %v811, %v807
    %v1040 = vpack.c.b16 %v812, %v808
    %v1041 = vpack.c.b16 %v817, %v813
    %v1042 = vpack.c.b16 %v818, %v814
    %v1043 = vpack.c.b16 %v819, %v815
    %v1044 = vpack.c.b16 %v820, %v816
    %v1045 = vpack.c.b16 %v825, %v821
    %v1046 = vpack.c.b16 %v826, %v822
    %v1047 = vpack.c.b16 %v827, %v823
    %v1048 = vpack.c.b16 %v828, %v824
    %v1049 = vpack.c.b16 %v833, %v829
    %v1050 = vpack.c.b16 %v834, %v830
    %v1051 = vpack.c.b16 %v835, %v831
    %v1052 = vpack.c.b16 %v836, %v832
    %v1053 = vpack.c.b16 %v841, %v837
    %v1054 = vpack.c.b16 %v842, %v838
    %v1055 = vpack.c.b16 %v843, %v839
    %v1056 = vpack.c.b16 %v844, %v840
    %v1057 = vpack.c.b16 %v849, %v845
    %v1058 = vpack.c.b16 %v850, %v846
    %v1059 = vpack.c.b16 %v851, %v847
    %v1060 = vpack.c.b16 %v852, %v848
    %v1061 = vpack.c.b16 %v857, %v853
    %v1062 = vpack.c.b16 %v858, %v854
    %v1063 = vpack.c.b16 %v859, %v855
    %v1064 = vpack.c.b16 %v860, %v856
    %v1065 = vpack.c.b16 %v865, %v861
    %v1066 = vpack.c.b16 %v866, %v862
    %v1067 = vpack.c.b16 %v867, %v863
    %v1068 = vpack.c.b16 %v868, %v864
    %v1069 = vpack.c.b16 %v873, %v869
    %v1070 = vpack.c.b16 %v874, %v870
    %v1071 = vpack.c.b16 %v875, %v871
    %v1072 = vpack.c.b16 %v876, %v872
    %v1073 = vpack.c.b16 %v881, %v877
    %v1074 = vpack.c.b16 %v882, %v878
    %v1075 = vpack.c.b16 %v883, %v879
    %v1076 = vpack.c.b16 %v884, %v880
    %v1077 = vpack.c.b16 %v889, %v885
    %v1078 = vpack.c.b16 %v890, %v886
    %v1079 = vpack.c.b16 %v891, %v887
    %v1080 = vpack.c.b16 %v892, %v888
    %v1081 = vpack.c.b16 %v897, %v893
    %v1082 = vpack.c.b16 %v898, %v894
    %v1083 = vpack.c.b16 %v899, %v895
    %v1084 = vpack.c.b16 %v900, %v896
    %v1085 = vpack.c.b16 %v905, %v901
    %v1086 = vpack.c.b16 %v906, %v902
    %v1087 = vpack.c.b16 %v907, %v903
    %v1088 = vpack.c.b16 %v908, %v904
    %v1089 = vpack.c.b16 %v913, %v909
    %v1090 = vpack.c.b16 %v914, %v910
    %v1091 = vpack.c.b16 %v915, %v911
    %v1092 = vpack.c.b16 %v916, %v912
    %v1093 = vpack.c.b16 %v921, %v917
    %v1094 = vpack.c.b16 %v922, %v918
    %v1095 = vpack.c.b16 %v923, %v919
    %v1096 = vpack.c.b16 %v924, %v920
    %v1097 = vpack.c.b16 %v929, %v925
    %v1098 = vpack.c.b16 %v930, %v926
    %v1099 = vpack.c.b16 %v931, %v927
    %v1100 = vpack.c.b16 %v932, %v928
    %v1101 = vpack.c.b16 %v937, %v933
    %v1102 = vpack.c.b16 %v938, %v934
    %v1103 = vpack.c.b16 %v939, %v935
    %v1104 = vpack.c.b16 %v940, %v936
    %v1105 = vpack.c.b16 %v945, %v941
    %v1106 = vpack.c.b16 %v946, %v942
    %v1107 = vpack.c.b16 %v947, %v943
    %v1108 = vpack.c.b16 %v948, %v944
    %v1109 = vpack.c.b16 %v953, %v949
    %v1110 = vpack.c.b16 %v954, %v950
    %v1111 = vpack.c.b16 %v955, %v951
    %v1112 = vpack.c.b16 %v956, %v952
    %v1113 = vpack.c.b16 %v961, %v957
    %v1114 = vpack.c.b16 %v962, %v958
    %v1115 = vpack.c.b16 %v963, %v959
    %v1116 = vpack.c.b16 %v964, %v960
    %v1117 = vpack.c.b16 %v969, %v965
    %v1118 = vpack.c.b16 %v970, %v966
    %v1119 = vpack.c.b16 %v971, %v967
    %v1120 = vpack.c.b16 %v972, %v968
    %v1121 = vpack.c.b16 %v977, %v973
    %v1122 = vpack.c.b16 %v978, %v974
    %v1123 = vpack.c.b16 %v979, %v975
    %v1124 = vpack.c.b16 %v980, %v976
    %v1125 = vpack.c.b16 %v985, %v981
    %v1126 = vpack.c.b16 %v986, %v982
    %v1127 = vpack.c.b16 %v987, %v983
    %v1128 = vpack.c.b16 %v988, %v984
    %v1129 = vpack.c.b16 %v993, %v989
    %v1130 = vpack.c.b16 %v994, %v990
    %v1131 = vpack.c.b16 %v995, %v991
    %v1132 = vpack.c.b16 %v996, %v992
    %v1133 = vpack.c.b16 %v1001, %v997
    %v1134 = vpack.c.b16 %v1002, %v998
    %v1135 = vpack.c.b16 %v1003, %v999
    %v1136 = vpack.c.b16 %v1004, %v1000
    %v1137 = vpack.c.b16 %v1009, %v1005
    %v1138 = vpack.c.b16 %v1010, %v1006
    %v1139 = vpack.c.b16 %v1011, %v1007
    %v1140 = vpack.c.b16 %v1012, %v1008
    %1269 = vmatprep.subr.bf16.mxu0 %v1042
    %1270 = vmatpush1.bf16.msra.mxu0 %v1041
    %1271 = vmatprep.subr.bf16.mxu0 %v1038
    %1272 = vmatpush1.bf16.msra.mxu0 %v1037
    %1273 = vmatprep.subr.bf16.mxu0 %v1034
    %1274 = vmatpush1.bf16.msra.mxu0 %v1033
    %1275 = vmatprep.subr.bf16.mxu0 %v1030
    %1276 = vmatpush1.bf16.msra.mxu0 %v1029
    %1277 = vmatprep.subr.bf16.mxu0 %v1026
    %1278 = vmatpush1.bf16.msra.mxu0 %v1025
    %1279 = vmatprep.subr.bf16.mxu0 %v1022
    %1280 = vmatpush1.bf16.msra.mxu0 %v1021
    %1281 = vmatprep.subr.bf16.mxu0 %v1018
    %1282 = vmatpush1.bf16.msra.mxu0 %v1017
    %1283 = vmatprep.subr.bf16.mxu0 %v1014
    %1284 = vmatpush1.bf16.msra.mxu0 %v1013
    %1285 = vmatprep.subr.bf16.mxu0 %v1074
    %1286 = vmatpush2.bf16.msra.mxu0 %v1073
    %1287 = vmatprep.subr.bf16.mxu0 %v1070
    %1288 = vmatpush2.bf16.msra.mxu0 %v1069
    %1289 = vmatprep.subr.bf16.mxu0 %v1066
    %1290 = vmatpush2.bf16.msra.mxu0 %v1065
    %1291 = vmatprep.subr.bf16.mxu0 %v1062
    %1292 = vmatpush2.bf16.msra.mxu0 %v1061
    %1293 = vmatprep.subr.bf16.mxu0 %v1058
    %1294 = vmatpush2.bf16.msra.mxu0 %v1057
    %1295 = vmatprep.subr.bf16.mxu0 %v1054
    %1296 = vmatpush2.bf16.msra.mxu0 %v1053
    %1297 = vmatprep.subr.bf16.mxu0 %v1050
    %1298 = vmatpush2.bf16.msra.mxu0 %v1049
    %1299 = vmatprep.subr.bf16.mxu0 %v1046
    %1300 = vmatpush2.bf16.msra.mxu0 %v1045
    %1301 = vmatprep.mubr.bf16.mxu0 %v604
    %1302 = vmatmul.mubr.bf16.gmra.mxu0 %v603
    %v1303 = vpop.f32.mrf.mxu0
    %v1304 = vadd.f32 %v612, %v1303
    %v1305 = vpop.f32.mrf.mxu0
    %v1306 = vadd.f32 %v616, %v1305
    %v1307 = vpop.f32.mrf.mxu0
    %v1308 = vpop.f32.mrf.mxu0
    %1309 = vdwg.mxu0
    %1310 = vmatprep.subr.bf16.mxu0 %v1106
    %1311 = vmatpush1.bf16.msra.mxu0 %v1105
    %1312 = vmatprep.subr.bf16.mxu0 %v1102
    %1313 = vmatpush1.bf16.msra.mxu0 %v1101
    %1314 = vmatprep.subr.bf16.mxu0 %v1098
    %1315 = vmatpush1.bf16.msra.mxu0 %v1097
    %1316 = vmatprep.subr.bf16.mxu0 %v1094
    %1317 = vmatpush1.bf16.msra.mxu0 %v1093
    %1318 = vmatprep.subr.bf16.mxu0 %v1090
    %1319 = vmatpush1.bf16.msra.mxu0 %v1089
    %1320 = vmatprep.subr.bf16.mxu0 %v1086
    %1321 = vmatpush1.bf16.msra.mxu0 %v1085
    %1322 = vmatprep.subr.bf16.mxu0 %v1082
    %1323 = vmatpush1.bf16.msra.mxu0 %v1081
    %1324 = vmatprep.subr.bf16.mxu0 %v1078
    %1325 = vmatpush1.bf16.msra.mxu0 %v1077
    %1326 = vmatprep.subr.bf16.mxu0 %v1138
    %1327 = vmatpush2.bf16.msra.mxu0 %v1137
    %1328 = vmatprep.subr.bf16.mxu0 %v1134
    %1329 = vmatpush2.bf16.msra.mxu0 %v1133
    %1330 = vmatprep.subr.bf16.mxu0 %v1130
    %1331 = vmatpush2.bf16.msra.mxu0 %v1129
    %1332 = vmatprep.subr.bf16.mxu0 %v1126
    %1333 = vmatpush2.bf16.msra.mxu0 %v1125
    %1334 = vmatprep.subr.bf16.mxu0 %v1122
    %1335 = vmatpush2.bf16.msra.mxu0 %v1121
    %1336 = vmatprep.subr.bf16.mxu0 %v1118
    %1337 = vmatpush2.bf16.msra.mxu0 %v1117
    %1338 = vmatprep.subr.bf16.mxu0 %v1114
    %1339 = vmatpush2.bf16.msra.mxu0 %v1113
    %1340 = vmatprep.subr.bf16.mxu0 %v1110
    %1341 = vmatpush2.bf16.msra.mxu0 %v1109
    %1342 = vmatprep.mubr.bf16.mxu0 %v606
    %1343 = vmatmul.mubr.bf16.gmra.mxu0 %v605
    %v1344 = vpop.f32.mrf.mxu0
    %v1345 = vadd.f32 %v1304, %v1344
    %v1346 = vpop.f32.mrf.mxu0
    %v1347 = vadd.f32 %v1306, %v1346
    %v1348 = vpop.f32.mrf.mxu0
    %v1349 = vpop.f32.mrf.mxu0
    %1350 = vdwg.mxu0
    %1351 = vmatprep.subr.bf16.mxu0 %v1044
    %1352 = vmatpush1.bf16.msra.mxu0 %v1043
    %1353 = vmatprep.subr.bf16.mxu0 %v1040
    %1354 = vmatpush1.bf16.msra.mxu0 %v1039
    %1355 = vmatprep.subr.bf16.mxu0 %v1036
    %1356 = vmatpush1.bf16.msra.mxu0 %v1035
    %1357 = vmatprep.subr.bf16.mxu0 %v1032
    %1358 = vmatpush1.bf16.msra.mxu0 %v1031
    %1359 = vmatprep.subr.bf16.mxu0 %v1028
    %1360 = vmatpush1.bf16.msra.mxu0 %v1027
    %1361 = vmatprep.subr.bf16.mxu0 %v1024
    %1362 = vmatpush1.bf16.msra.mxu0 %v1023
    %1363 = vmatprep.subr.bf16.mxu0 %v1020
    %1364 = vmatpush1.bf16.msra.mxu0 %v1019
    %1365 = vmatprep.subr.bf16.mxu0 %v1016
    %1366 = vmatpush1.bf16.msra.mxu0 %v1015
    %1367 = vmatprep.subr.bf16.mxu0 %v1076
    %1368 = vmatpush2.bf16.msra.mxu0 %v1075
    %1369 = vmatprep.subr.bf16.mxu0 %v1072
    %1370 = vmatpush2.bf16.msra.mxu0 %v1071
    %1371 = vmatprep.subr.bf16.mxu0 %v1068
    %1372 = vmatpush2.bf16.msra.mxu0 %v1067
    %1373 = vmatprep.subr.bf16.mxu0 %v1064
    %1374 = vmatpush2.bf16.msra.mxu0 %v1063
    %1375 = vmatprep.subr.bf16.mxu0 %v1060
    %1376 = vmatpush2.bf16.msra.mxu0 %v1059
    %1377 = vmatprep.subr.bf16.mxu0 %v1056
    %1378 = vmatpush2.bf16.msra.mxu0 %v1055
    %1379 = vmatprep.subr.bf16.mxu0 %v1052
    %1380 = vmatpush2.bf16.msra.mxu0 %v1051
    %1381 = vmatprep.subr.bf16.mxu0 %v1048
    %1382 = vmatpush2.bf16.msra.mxu0 %v1047
    %1383 = vmatprep.mubr.bf16.mxu0 %v604
    %1384 = vmatmul.mubr.bf16.gmra.mxu0 %v603
    %v1385 = vpop.f32.mrf.mxu0
    %v1386 = vadd.f32 %v620, %v1385
    %v1387 = vpop.f32.mrf.mxu0
    %v1388 = vadd.f32 %v624, %v1387
    %v1389 = vpop.f32.mrf.mxu0
    %v1390 = vpop.f32.mrf.mxu0
    %1391 = vdwg.mxu0
    %1392 = vmatprep.subr.bf16.mxu0 %v1108
    %1393 = vmatpush1.bf16.msra.mxu0 %v1107
    %1394 = vmatprep.subr.bf16.mxu0 %v1104
    %1395 = vmatpush1.bf16.msra.mxu0 %v1103
    %1396 = vmatprep.subr.bf16.mxu0 %v1100
    %1397 = vmatpush1.bf16.msra.mxu0 %v1099
    %1398 = vmatprep.subr.bf16.mxu0 %v1096
    %1399 = vmatpush1.bf16.msra.mxu0 %v1095
    %1400 = vmatprep.subr.bf16.mxu0 %v1092
    %1401 = vmatpush1.bf16.msra.mxu0 %v1091
    %1402 = vmatprep.subr.bf16.mxu0 %v1088
    %1403 = vmatpush1.bf16.msra.mxu0 %v1087
    %1404 = vmatprep.subr.bf16.mxu0 %v1084
    %1405 = vmatpush1.bf16.msra.mxu0 %v1083
    %1406 = vmatprep.subr.bf16.mxu0 %v1080
    %1407 = vmatpush1.bf16.msra.mxu0 %v1079
    %1408 = vmatprep.subr.bf16.mxu0 %v1140
    %1409 = vmatpush2.bf16.msra.mxu0 %v1139
    %1410 = vmatprep.subr.bf16.mxu0 %v1136
    %1411 = vmatpush2.bf16.msra.mxu0 %v1135
    %1412 = vmatprep.subr.bf16.mxu0 %v1132
    %1413 = vmatpush2.bf16.msra.mxu0 %v1131
    %1414 = vmatprep.subr.bf16.mxu0 %v1128
    %1415 = vmatpush2.bf16.msra.mxu0 %v1127
    %1416 = vmatprep.subr.bf16.mxu0 %v1124
    %1417 = vmatpush2.bf16.msra.mxu0 %v1123
    %1418 = vmatprep.subr.bf16.mxu0 %v1120
    %1419 = vmatpush2.bf16.msra.mxu0 %v1119
    %1420 = vmatprep.subr.bf16.mxu0 %v1116
    %1421 = vmatpush2.bf16.msra.mxu0 %v1115
    %1422 = vmatprep.subr.bf16.mxu0 %v1112
    %1423 = vmatpush2.bf16.msra.mxu0 %v1111
    %1424 = vmatprep.mubr.bf16.mxu0 %v606
    %1425 = vmatmul.mubr.bf16.gmra.mxu0 %v605
    %v1426 = vpop.f32.mrf.mxu0
    %v1427 = vadd.f32 %v1386, %v1426
    %v1428 = vpop.f32.mrf.mxu0
    %v1429 = vadd.f32 %v1388, %v1428
    %v1430 = vpop.f32.mrf.mxu0
    %v1431 = vpop.f32.mrf.mxu0
    %1432 = vdwg.mxu0
    %v1433 = vxor.u32 %v1345, 2147483648
    %v1434 = vxor.u32 %v1347, 2147483648
    %v1435 = vxor.u32 %v1427, 2147483648
    %v1436 = vxor.u32 %v1429, 2147483648
    %v1437 = vmul.f32 %v1433, 1.442695
    %v1438 = vpow.pop %v1437
    %v1439 = vmul.f32 %v1434, 1.442695
    %v1440 = vpow.pop %v1439
    %v1441 = vmul.f32 %v1435, 1.442695
    %v1442 = vpow.pop %v1441
    %v1443 = vmul.f32 %v1436, 1.442695
    %v1444 = vpow.pop %v1443
    %v1445 = vadd.f32 %v1438, 1.0
    %v1446 = vadd.f32 %v1440, 1.0
    %v1447 = vadd.f32 %v1442, 1.0
    %v1448 = vadd.f32 %v1444, 1.0
    %v1449 = vrcp.pop %v1445
    %v1450 = vmul.f32 1.0, %v1449
    %v1451 = vrcp.pop %v1446
    %v1452 = vmul.f32 1.0, %v1451
    %v1453 = vrcp.pop %v1447
    %v1454 = vmul.f32 1.0, %v1453
    %v1455 = vrcp.pop %v1448
    %v1456 = vmul.f32 1.0, %v1455
    %v1457 = vmul.f32 %v1345, %v1450
    %v1458 = vmul.f32 %v1347, %v1452
    %v1459 = vmul.f32 %v1427, %v1454
    %v1460 = vmul.f32 %v1429, %v1456
    %v1461 = vld [vmem:[#allocation6] sm:$0xff]
    %v1462 = vld [vmem:[#allocation6 + $0x8] sm:$0xff]
    %v1463 = vld [vmem:[#allocation6 + $0x10] sm:$0xff]
    %v1464 = vld [vmem:[#allocation6 + $0x18] sm:$0xff]
    %v1465 = vld [vmem:[#allocation6 + $0x20] sm:$0xff]
    %v1466 = vld [vmem:[#allocation6 + $0x28] sm:$0xff]
    %v1467 = vld [vmem:[#allocation6 + $0x30] sm:$0xff]
    %v1468 = vld [vmem:[#allocation6 + $0x38] sm:$0xff]
    %v1469 = vld [vmem:[#allocation6 + $0x40] sm:$0xff]
    %v1470 = vld [vmem:[#allocation6 + $0x48] sm:$0xff]
    %v1471 = vld [vmem:[#allocation6 + $0x50] sm:$0xff]
    %v1472 = vld [vmem:[#allocation6 + $0x58] sm:$0xff]
    %v1473 = vld [vmem:[#allocation6 + $0x60] sm:$0xff]
    %v1474 = vld [vmem:[#allocation6 + $0x68] sm:$0xff]
    %v1475 = vld [vmem:[#allocation6 + $0x70] sm:$0xff]
    %v1476 = vld [vmem:[#allocation6 + $0x78] sm:$0xff]
    %v1477 = vld [vmem:[#allocation6 + $0x80] sm:$0xff]
    %v1478 = vld [vmem:[#allocation6 + $0x88] sm:$0xff]
    %v1479 = vld [vmem:[#allocation6 + $0x90] sm:$0xff]
    %v1480 = vld [vmem:[#allocation6 + $0x98] sm:$0xff]
    %v1481 = vld [vmem:[#allocation6 + $0xa0] sm:$0xff]
    %v1482 = vld [vmem:[#allocation6 + $0xa8] sm:$0xff]
    %v1483 = vld [vmem:[#allocation6 + $0xb0] sm:$0xff]
    %v1484 = vld [vmem:[#allocation6 + $0xb8] sm:$0xff]
    %v1485 = vld [vmem:[#allocation6 + $0xc0] sm:$0xff]
    %v1486 = vld [vmem:[#allocation6 + $0xc8] sm:$0xff]
    %v1487 = vld [vmem:[#allocation6 + $0xd0] sm:$0xff]
    %v1488 = vld [vmem:[#allocation6 + $0xd8] sm:$0xff]
    %v1489 = vld [vmem:[#allocation6 + $0xe0] sm:$0xff]
    %v1490 = vld [vmem:[#allocation6 + $0xe8] sm:$0xff]
    %v1491 = vld [vmem:[#allocation6 + $0xf0] sm:$0xff]
    %v1492 = vld [vmem:[#allocation6 + $0xf8] sm:$0xff]
    %v1493 = vld [vmem:[#allocation6 + $0x100] sm:$0xff]
    %v1494 = vld [vmem:[#allocation6 + $0x108] sm:$0xff]
    %v1495 = vld [vmem:[#allocation6 + $0x110] sm:$0xff]
    %v1496 = vld [vmem:[#allocation6 + $0x118] sm:$0xff]
    %v1497 = vld [vmem:[#allocation6 + $0x120] sm:$0xff]
    %v1498 = vld [vmem:[#allocation6 + $0x128] sm:$0xff]
    %v1499 = vld [vmem:[#allocation6 + $0x130] sm:$0xff]
    %v1500 = vld [vmem:[#allocation6 + $0x138] sm:$0xff]
    %v1501 = vld [vmem:[#allocation6 + $0x140] sm:$0xff]
    %v1502 = vld [vmem:[#allocation6 + $0x148] sm:$0xff]
    %v1503 = vld [vmem:[#allocation6 + $0x150] sm:$0xff]
    %v1504 = vld [vmem:[#allocation6 + $0x158] sm:$0xff]
    %v1505 = vld [vmem:[#allocation6 + $0x160] sm:$0xff]
    %v1506 = vld [vmem:[#allocation6 + $0x168] sm:$0xff]
    %v1507 = vld [vmem:[#allocation6 + $0x170] sm:$0xff]
    %v1508 = vld [vmem:[#allocation6 + $0x178] sm:$0xff]
    %v1509 = vld [vmem:[#allocation6 + $0x180] sm:$0xff]
    %v1510 = vld [vmem:[#allocation6 + $0x188] sm:$0xff]
    %v1511 = vld [vmem:[#allocation6 + $0x190] sm:$0xff]
    %v1512 = vld [vmem:[#allocation6 + $0x198] sm:$0xff]
    %v1513 = vld [vmem:[#allocation6 + $0x1a0] sm:$0xff]
    %v1514 = vld [vmem:[#allocation6 + $0x1a8] sm:$0xff]
    %v1515 = vld [vmem:[#allocation6 + $0x1b0] sm:$0xff]
    %v1516 = vld [vmem:[#allocation6 + $0x1b8] sm:$0xff]
    %v1517 = vld [vmem:[#allocation6 + $0x1c0] sm:$0xff]
    %v1518 = vld [vmem:[#allocation6 + $0x1c8] sm:$0xff]
    %v1519 = vld [vmem:[#allocation6 + $0x1d0] sm:$0xff]
    %v1520 = vld [vmem:[#allocation6 + $0x1d8] sm:$0xff]
    %v1521 = vld [vmem:[#allocation6 + $0x1e0] sm:$0xff]
    %v1522 = vld [vmem:[#allocation6 + $0x1e8] sm:$0xff]
    %v1523 = vld [vmem:[#allocation6 + $0x1f0] sm:$0xff]
    %v1524 = vld [vmem:[#allocation6 + $0x1f8] sm:$0xff]
    %v1525 = vpack.c.bf16 %v1457, %v1457
    %v1526 = vpack.c.bf16 %v1458, %v1458
    %v1527 = vpack.c.bf16 %v1459, %v1459
    %v1528 = vpack.c.bf16 %v1460, %v1460
    %v1529 = vld [vmem:[%s8] sm:$0x3]
    %v1531 = vlaneseq
    %v1532 = vshrl.u32 %v1531, 7
    %v1533 = vsub.s32 0, %v1532
    %v1534 = vrot.slane %v1529, %v1533
    %v1535 = vlaneseq
    %v1536 = vshrl.u32 %v1535, 7
    %v1537 = vsub.s32 1, %v1536
    %v1538 = vrot.slane %v1529, %v1537
    %v1605 = vunpack.c.l.b16 %v1461
    %v1606 = vunpack.c.h.b16 %v1461
    %v1607 = vunpack.c.l.b16 %v1462
    %v1608 = vunpack.c.h.b16 %v1462
    %v1609 = vunpack.c.l.b16 %v1463
    %v1610 = vunpack.c.h.b16 %v1463
    %v1611 = vunpack.c.l.b16 %v1464
    %v1612 = vunpack.c.h.b16 %v1464
    %v1613 = vunpack.c.l.b16 %v1465
    %v1614 = vunpack.c.h.b16 %v1465
    %v1615 = vunpack.c.l.b16 %v1466
    %v1616 = vunpack.c.h.b16 %v1466
    %v1617 = vunpack.c.l.b16 %v1467
    %v1618 = vunpack.c.h.b16 %v1467
    %v1619 = vunpack.c.l.b16 %v1468
    %v1620 = vunpack.c.h.b16 %v1468
    %v1621 = vunpack.c.l.b16 %v1469
    %v1622 = vunpack.c.h.b16 %v1469
    %v1623 = vunpack.c.l.b16 %v1470
    %v1624 = vunpack.c.h.b16 %v1470
    %v1625 = vunpack.c.l.b16 %v1471
    %v1626 = vunpack.c.h.b16 %v1471
    %v1627 = vunpack.c.l.b16 %v1472
    %v1628 = vunpack.c.h.b16 %v1472
    %v1629 = vunpack.c.l.b16 %v1473
    %v1630 = vunpack.c.h.b16 %v1473
    %v1631 = vunpack.c.l.b16 %v1474
    %v1632 = vunpack.c.h.b16 %v1474
    %v1633 = vunpack.c.l.b16 %v1475
    %v1634 = vunpack.c.h.b16 %v1475
    %v1635 = vunpack.c.l.b16 %v1476
    %v1636 = vunpack.c.h.b16 %v1476
    %v1637 = vunpack.c.l.b16 %v1477
    %v1638 = vunpack.c.h.b16 %v1477
    %v1639 = vunpack.c.l.b16 %v1478
    %v1640 = vunpack.c.h.b16 %v1478
    %v1641 = vunpack.c.l.b16 %v1479
    %v1642 = vunpack.c.h.b16 %v1479
    %v1643 = vunpack.c.l.b16 %v1480
    %v1644 = vunpack.c.h.b16 %v1480
    %v1645 = vunpack.c.l.b16 %v1481
    %v1646 = vunpack.c.h.b16 %v1481
    %v1647 = vunpack.c.l.b16 %v1482
    %v1648 = vunpack.c.h.b16 %v1482
    %v1649 = vunpack.c.l.b16 %v1483
    %v1650 = vunpack.c.h.b16 %v1483
    %v1651 = vunpack.c.l.b16 %v1484
    %v1652 = vunpack.c.h.b16 %v1484
    %v1653 = vunpack.c.l.b16 %v1485
    %v1654 = vunpack.c.h.b16 %v1485
    %v1655 = vunpack.c.l.b16 %v1486
    %v1656 = vunpack.c.h.b16 %v1486
    %v1657 = vunpack.c.l.b16 %v1487
    %v1658 = vunpack.c.h.b16 %v1487
    %v1659 = vunpack.c.l.b16 %v1488
    %v1660 = vunpack.c.h.b16 %v1488
    %v1661 = vunpack.c.l.b16 %v1489
    %v1662 = vunpack.c.h.b16 %v1489
    %v1663 = vunpack.c.l.b16 %v1490
    %v1664 = vunpack.c.h.b16 %v1490
    %v1665 = vunpack.c.l.b16 %v1491
    %v1666 = vunpack.c.h.b16 %v1491
    %v1667 = vunpack.c.l.b16 %v1492
    %v1668 = vunpack.c.h.b16 %v1492
    %v1669 = vunpack.c.l.b16 %v1493
    %v1670 = vunpack.c.h.b16 %v1493
    %v1671 = vunpack.c.l.b16 %v1494
    %v1672 = vunpack.c.h.b16 %v1494
    %v1673 = vunpack.c.l.b16 %v1495
    %v1674 = vunpack.c.h.b16 %v1495
    %v1675 = vunpack.c.l.b16 %v1496
    %v1676 = vunpack.c.h.b16 %v1496
    %v1677 = vunpack.c.l.b16 %v1497
    %v1678 = vunpack.c.h.b16 %v1497
    %v1679 = vunpack.c.l.b16 %v1498
    %v1680 = vunpack.c.h.b16 %v1498
    %v1681 = vunpack.c.l.b16 %v1499
    %v1682 = vunpack.c.h.b16 %v1499
    %v1683 = vunpack.c.l.b16 %v1500
    %v1684 = vunpack.c.h.b16 %v1500
    %v1685 = vunpack.c.l.b16 %v1501
    %v1686 = vunpack.c.h.b16 %v1501
    %v1687 = vunpack.c.l.b16 %v1502
    %v1688 = vunpack.c.h.b16 %v1502
    %v1689 = vunpack.c.l.b16 %v1503
    %v1690 = vunpack.c.h.b16 %v1503
    %v1691 = vunpack.c.l.b16 %v1504
    %v1692 = vunpack.c.h.b16 %v1504
    %v1693 = vunpack.c.l.b16 %v1505
    %v1694 = vunpack.c.h.b16 %v1505
    %v1695 = vunpack.c.l.b16 %v1506
    %v1696 = vunpack.c.h.b16 %v1506
    %v1697 = vunpack.c.l.b16 %v1507
    %v1698 = vunpack.c.h.b16 %v1507
    %v1699 = vunpack.c.l.b16 %v1508
    %v1700 = vunpack.c.h.b16 %v1508
    %v1701 = vunpack.c.l.b16 %v1509
    %v1702 = vunpack.c.h.b16 %v1509
    %v1703 = vunpack.c.l.b16 %v1510
    %v1704 = vunpack.c.h.b16 %v1510
    %v1705 = vunpack.c.l.b16 %v1511
    %v1706 = vunpack.c.h.b16 %v1511
    %v1707 = vunpack.c.l.b16 %v1512
    %v1708 = vunpack.c.h.b16 %v1512
    %v1709 = vunpack.c.l.b16 %v1513
    %v1710 = vunpack.c.h.b16 %v1513
    %v1711 = vunpack.c.l.b16 %v1514
    %v1712 = vunpack.c.h.b16 %v1514
    %v1713 = vunpack.c.l.b16 %v1515
    %v1714 = vunpack.c.h.b16 %v1515
    %v1715 = vunpack.c.l.b16 %v1516
    %v1716 = vunpack.c.h.b16 %v1516
    %v1717 = vunpack.c.l.b16 %v1517
    %v1718 = vunpack.c.h.b16 %v1517
    %v1719 = vunpack.c.l.b16 %v1518
    %v1720 = vunpack.c.h.b16 %v1518
    %v1721 = vunpack.c.l.b16 %v1519
    %v1722 = vunpack.c.h.b16 %v1519
    %v1723 = vunpack.c.l.b16 %v1520
    %v1724 = vunpack.c.h.b16 %v1520
    %v1725 = vunpack.c.l.b16 %v1521
    %v1726 = vunpack.c.h.b16 %v1521
    %v1727 = vunpack.c.l.b16 %v1522
    %v1728 = vunpack.c.h.b16 %v1522
    %v1729 = vunpack.c.l.b16 %v1523
    %v1730 = vunpack.c.h.b16 %v1523
    %v1731 = vunpack.c.l.b16 %v1524
    %v1732 = vunpack.c.h.b16 %v1524
    %v1733 = vpack.c.b16 %v1607, %v1605
    %v1734 = vpack.c.b16 %v1608, %v1606
    %v1735 = vpack.c.b16 %v1611, %v1609
    %v1736 = vpack.c.b16 %v1612, %v1610
    %v1737 = vpack.c.b16 %v1615, %v1613
    %v1738 = vpack.c.b16 %v1616, %v1614
    %v1739 = vpack.c.b16 %v1619, %v1617
    %v1740 = vpack.c.b16 %v1620, %v1618
    %v1741 = vpack.c.b16 %v1623, %v1621
    %v1742 = vpack.c.b16 %v1624, %v1622
    %v1743 = vpack.c.b16 %v1627, %v1625
    %v1744 = vpack.c.b16 %v1628, %v1626
    %v1745 = vpack.c.b16 %v1631, %v1629
    %v1746 = vpack.c.b16 %v1632, %v1630
    %v1747 = vpack.c.b16 %v1635, %v1633
    %v1748 = vpack.c.b16 %v1636, %v1634
    %v1749 = vpack.c.b16 %v1639, %v1637
    %v1750 = vpack.c.b16 %v1640, %v1638
    %v1751 = vpack.c.b16 %v1643, %v1641
    %v1752 = vpack.c.b16 %v1644, %v1642
    %v1753 = vpack.c.b16 %v1647, %v1645
    %v1754 = vpack.c.b16 %v1648, %v1646
    %v1755 = vpack.c.b16 %v1651, %v1649
    %v1756 = vpack.c.b16 %v1652, %v1650
    %v1757 = vpack.c.b16 %v1655, %v1653
    %v1758 = vpack.c.b16 %v1656, %v1654
    %v1759 = vpack.c.b16 %v1659, %v1657
    %v1760 = vpack.c.b16 %v1660, %v1658
    %v1761 = vpack.c.b16 %v1663, %v1661
    %v1762 = vpack.c.b16 %v1664, %v1662
    %v1763 = vpack.c.b16 %v1667, %v1665
    %v1764 = vpack.c.b16 %v1668, %v1666
    %v1765 = vpack.c.b16 %v1671, %v1669
    %v1766 = vpack.c.b16 %v1672, %v1670
    %v1767 = vpack.c.b16 %v1675, %v1673
    %v1768 = vpack.c.b16 %v1676, %v1674
    %v1769 = vpack.c.b16 %v1679, %v1677
    %v1770 = vpack.c.b16 %v1680, %v1678
    %v1771 = vpack.c.b16 %v1683, %v1681
    %v1772 = vpack.c.b16 %v1684, %v1682
    %v1773 = vpack.c.b16 %v1687, %v1685
    %v1774 = vpack.c.b16 %v1688, %v1686
    %v1775 = vpack.c.b16 %v1691, %v1689
    %v1776 = vpack.c.b16 %v1692, %v1690
    %v1777 = vpack.c.b16 %v1695, %v1693
    %v1778 = vpack.c.b16 %v1696, %v1694
    %v1779 = vpack.c.b16 %v1699, %v1697
    %v1780 = vpack.c.b16 %v1700, %v1698
    %v1781 = vpack.c.b16 %v1703, %v1701
    %v1782 = vpack.c.b16 %v1704, %v1702
    %v1783 = vpack.c.b16 %v1707, %v1705
    %v1784 = vpack.c.b16 %v1708, %v1706
    %v1785 = vpack.c.b16 %v1711, %v1709
    %v1786 = vpack.c.b16 %v1712, %v1710
    %v1787 = vpack.c.b16 %v1715, %v1713
    %v1788 = vpack.c.b16 %v1716, %v1714
    %v1789 = vpack.c.b16 %v1719, %v1717
    %v1790 = vpack.c.b16 %v1720, %v1718
    %v1791 = vpack.c.b16 %v1723, %v1721
    %v1792 = vpack.c.b16 %v1724, %v1722
    %v1793 = vpack.c.b16 %v1727, %v1725
    %v1794 = vpack.c.b16 %v1728, %v1726
    %v1795 = vpack.c.b16 %v1731, %v1729
    %v1796 = vpack.c.b16 %v1732, %v1730
    %1861 = vmatprep.subr.bf16.mxu0 %v1748
    %1862 = vmatpush1.bf16.msra.mxu0 %v1747
    %1863 = vmatprep.subr.bf16.mxu0 %v1746
    %1864 = vmatpush1.bf16.msra.mxu0 %v1745
    %1865 = vmatprep.subr.bf16.mxu0 %v1744
    %1866 = vmatpush1.bf16.msra.mxu0 %v1743
    %1867 = vmatprep.subr.bf16.mxu0 %v1742
    %1868 = vmatpush1.bf16.msra.mxu0 %v1741
    %1869 = vmatprep.subr.bf16.mxu0 %v1740
    %1870 = vmatpush1.bf16.msra.mxu0 %v1739
    %1871 = vmatprep.subr.bf16.mxu0 %v1738
    %1872 = vmatpush1.bf16.msra.mxu0 %v1737
    %1873 = vmatprep.subr.bf16.mxu0 %v1736
    %1874 = vmatpush1.bf16.msra.mxu0 %v1735
    %1875 = vmatprep.subr.bf16.mxu0 %v1734
    %1876 = vmatpush1.bf16.msra.mxu0 %v1733
    %1877 = vmatprep.subr.bf16.mxu0 %v1764
    %1878 = vmatpush2.bf16.msra.mxu0 %v1763
    %1879 = vmatprep.subr.bf16.mxu0 %v1762
    %1880 = vmatpush2.bf16.msra.mxu0 %v1761
    %1881 = vmatprep.subr.bf16.mxu0 %v1760
    %1882 = vmatpush2.bf16.msra.mxu0 %v1759
    %1883 = vmatprep.subr.bf16.mxu0 %v1758
    %1884 = vmatpush2.bf16.msra.mxu0 %v1757
    %1885 = vmatprep.subr.bf16.mxu0 %v1756
    %1886 = vmatpush2.bf16.msra.mxu0 %v1755
    %1887 = vmatprep.subr.bf16.mxu0 %v1754
    %1888 = vmatpush2.bf16.msra.mxu0 %v1753
    %1889 = vmatprep.subr.bf16.mxu0 %v1752
    %1890 = vmatpush2.bf16.msra.mxu0 %v1751
    %1891 = vmatprep.subr.bf16.mxu0 %v1750
    %1892 = vmatpush2.bf16.msra.mxu0 %v1749
    %1893 = vmatprep.mubr.bf16.mxu0 %v1526
    %1894 = vmatmul.mubr.bf16.gmra.mxu0 %v1525
    %v1895 = vpop.f32.mrf.mxu0
    %v1896 = vadd.f32 %v1534, %v1895
    %v1897 = vpop.f32.mrf.mxu0
    %v1898 = vadd.f32 %v1538, %v1897
    %v1899 = vpop.f32.mrf.mxu0
    %v1900 = vpop.f32.mrf.mxu0
    %1901 = vdwg.mxu0
    %1902 = vmatprep.subr.bf16.mxu0 %v1780
    %1903 = vmatpush1.bf16.msra.mxu0 %v1779
    %1904 = vmatprep.subr.bf16.mxu0 %v1778
    %1905 = vmatpush1.bf16.msra.mxu0 %v1777
    %1906 = vmatprep.subr.bf16.mxu0 %v1776
    %1907 = vmatpush1.bf16.msra.mxu0 %v1775
    %1908 = vmatprep.subr.bf16.mxu0 %v1774
    %1909 = vmatpush1.bf16.msra.mxu0 %v1773
    %1910 = vmatprep.subr.bf16.mxu0 %v1772
    %1911 = vmatpush1.bf16.msra.mxu0 %v1771
    %1912 = vmatprep.subr.bf16.mxu0 %v1770
    %1913 = vmatpush1.bf16.msra.mxu0 %v1769
    %1914 = vmatprep.subr.bf16.mxu0 %v1768
    %1915 = vmatpush1.bf16.msra.mxu0 %v1767
    %1916 = vmatprep.subr.bf16.mxu0 %v1766
    %1917 = vmatpush1.bf16.msra.mxu0 %v1765
    %1918 = vmatprep.subr.bf16.mxu0 %v1796
    %1919 = vmatpush2.bf16.msra.mxu0 %v1795
    %1920 = vmatprep.subr.bf16.mxu0 %v1794
    %1921 = vmatpush2.bf16.msra.mxu0 %v1793
    %1922 = vmatprep.subr.bf16.mxu0 %v1792
    %1923 = vmatpush2.bf16.msra.mxu0 %v1791
    %1924 = vmatprep.subr.bf16.mxu0 %v1790
    %1925 = vmatpush2.bf16.msra.mxu0 %v1789
    %1926 = vmatprep.subr.bf16.mxu0 %v1788
    %1927 = vmatpush2.bf16.msra.mxu0 %v1787
    %1928 = vmatprep.subr.bf16.mxu0 %v1786
    %1929 = vmatpush2.bf16.msra.mxu0 %v1785
    %1930 = vmatprep.subr.bf16.mxu0 %v1784
    %1931 = vmatpush2.bf16.msra.mxu0 %v1783
    %1932 = vmatprep.subr.bf16.mxu0 %v1782
    %1933 = vmatpush2.bf16.msra.mxu0 %v1781
    %1934 = vmatprep.mubr.bf16.mxu0 %v1528
    %1935 = vmatmul.mubr.bf16.gmra.mxu0 %v1527
    %v1936 = vpop.f32.mrf.mxu0
    %v1937 = vadd.f32 %v1896, %v1936
    %v1938 = vpop.f32.mrf.mxu0
    %v1939 = vadd.f32 %v1898, %v1938
    %v1940 = vpop.f32.mrf.mxu0
    %v1941 = vpop.f32.mrf.mxu0
    %1942 = vdwg.mxu0
    %v1943 = vxor.u32 %v1937, 2147483648
    %v1944 = vxor.u32 %v1939, 2147483648
    %v1945 = vmul.f32 %v1943, 1.442695
    %v1946 = vpow.pop %v1945
    %v1947 = vmul.f32 %v1944, 1.442695
    %v1948 = vpow.pop %v1947
    %v1949 = vadd.f32 %v1946, 1.0
    %v1950 = vadd.f32 %v1948, 1.0
    %v1951 = vrcp.pop %v1949
    %v1952 = vmul.f32 1.0, %v1951
    %v1953 = vrcp.pop %v1950
    %v1954 = vmul.f32 1.0, %v1953
    %v1955 = vmul.f32 %v1937, %v1952
    %v1956 = vmul.f32 %v1939, %v1954
    %v1957 = vld [vmem:[#allocation7] sm:$0xf]
    %v1958 = vld [vmem:[#allocation7 + $0x4] sm:$0xf]
    %v1959 = vld [vmem:[#allocation7 + $0x8] sm:$0xf]
    %v1960 = vld [vmem:[#allocation7 + $0xc] sm:$0xf]
    %v1961 = vld [vmem:[#allocation7 + $0x10] sm:$0xf]
    %v1962 = vld [vmem:[#allocation7 + $0x14] sm:$0xf]
    %v1963 = vld [vmem:[#allocation7 + $0x18] sm:$0xf]
    %v1964 = vld [vmem:[#allocation7 + $0x1c] sm:$0xf]
    %v1965 = vld [vmem:[#allocation7 + $0x20] sm:$0xf]
    %v1966 = vld [vmem:[#allocation7 + $0x24] sm:$0xf]
    %v1967 = vld [vmem:[#allocation7 + $0x28] sm:$0xf]
    %v1968 = vld [vmem:[#allocation7 + $0x2c] sm:$0xf]
    %v1969 = vld [vmem:[#allocation7 + $0x30] sm:$0xf]
    %v1970 = vld [vmem:[#allocation7 + $0x34] sm:$0xf]
    %v1971 = vld [vmem:[#allocation7 + $0x38] sm:$0xf]
    %v1972 = vld [vmem:[#allocation7 + $0x3c] sm:$0xf]
    %v1973 = vld [vmem:[#allocation7 + $0x40] sm:$0xf]
    %v1974 = vld [vmem:[#allocation7 + $0x44] sm:$0xf]
    %v1975 = vld [vmem:[#allocation7 + $0x48] sm:$0xf]
    %v1976 = vld [vmem:[#allocation7 + $0x4c] sm:$0xf]
    %v1977 = vld [vmem:[#allocation7 + $0x50] sm:$0xf]
    %v1978 = vld [vmem:[#allocation7 + $0x54] sm:$0xf]
    %v1979 = vld [vmem:[#allocation7 + $0x58] sm:$0xf]
    %v1980 = vld [vmem:[#allocation7 + $0x5c] sm:$0xf]
    %v1981 = vld [vmem:[#allocation7 + $0x60] sm:$0xf]
    %v1982 = vld [vmem:[#allocation7 + $0x64] sm:$0xf]
    %v1983 = vld [vmem:[#allocation7 + $0x68] sm:$0xf]
    %v1984 = vld [vmem:[#allocation7 + $0x6c] sm:$0xf]
    %v1985 = vld [vmem:[#allocation7 + $0x70] sm:$0xf]
    %v1986 = vld [vmem:[#allocation7 + $0x74] sm:$0xf]
    %v1987 = vld [vmem:[#allocation7 + $0x78] sm:$0xf]
    %v1988 = vld [vmem:[#allocation7 + $0x7c] sm:$0xf]
    %v1989 = vpack.c.bf16 %v1955, %v1955
    %v1990 = vpack.c.bf16 %v1956, %v1956
    %v1991 = vld [vmem:[%s10] sm:$0x1]
    %v1993 = vlaneseq
    %v1994 = vshrl.u32 %v1993, 7
    %v1995 = vsub.s32 0, %v1994
    %v1996 = vrot.slane %v1991, %v1995
    %v2030 = vunpack.c.l.b16 %v1957
    %v2031 = vunpack.c.l.b16 %v1958
    %v2032 = vunpack.c.l.b16 %v1959
    %v2033 = vunpack.c.l.b16 %v1960
    %v2034 = vunpack.c.l.b16 %v1961
    %v2035 = vunpack.c.l.b16 %v1962
    %v2036 = vunpack.c.l.b16 %v1963
    %v2037 = vunpack.c.l.b16 %v1964
    %v2038 = vunpack.c.l.b16 %v1965
    %v2039 = vunpack.c.l.b16 %v1966
    %v2040 = vunpack.c.l.b16 %v1967
    %v2041 = vunpack.c.l.b16 %v1968
    %v2042 = vunpack.c.l.b16 %v1969
    %v2043 = vunpack.c.l.b16 %v1970
    %v2044 = vunpack.c.l.b16 %v1971
    %v2045 = vunpack.c.l.b16 %v1972
    %v2046 = vunpack.c.l.b16 %v1973
    %v2047 = vunpack.c.l.b16 %v1974
    %v2048 = vunpack.c.l.b16 %v1975
    %v2049 = vunpack.c.l.b16 %v1976
    %v2050 = vunpack.c.l.b16 %v1977
    %v2051 = vunpack.c.l.b16 %v1978
    %v2052 = vunpack.c.l.b16 %v1979
    %v2053 = vunpack.c.l.b16 %v1980
    %v2054 = vunpack.c.l.b16 %v1981
    %v2055 = vunpack.c.l.b16 %v1982
    %v2056 = vunpack.c.l.b16 %v1983
    %v2057 = vunpack.c.l.b16 %v1984
    %v2058 = vunpack.c.l.b16 %v1985
    %v2059 = vunpack.c.l.b16 %v1986
    %v2060 = vunpack.c.l.b16 %v1987
    %v2061 = vunpack.c.l.b16 %v1988
    %v2062 = vpack.c.b16 %v2031, %v2030
    %v2063 = vpack.c.b16 %v2033, %v2032
    %v2064 = vpack.c.b16 %v2035, %v2034
    %v2065 = vpack.c.b16 %v2037, %v2036
    %v2066 = vpack.c.b16 %v2039, %v2038
    %v2067 = vpack.c.b16 %v2041, %v2040
    %v2068 = vpack.c.b16 %v2043, %v2042
    %v2069 = vpack.c.b16 %v2045, %v2044
    %v2070 = vpack.c.b16 %v2047, %v2046
    %v2071 = vpack.c.b16 %v2049, %v2048
    %v2072 = vpack.c.b16 %v2051, %v2050
    %v2073 = vpack.c.b16 %v2053, %v2052
    %v2074 = vpack.c.b16 %v2055, %v2054
    %v2075 = vpack.c.b16 %v2057, %v2056
    %v2076 = vpack.c.b16 %v2059, %v2058
    %v2077 = vpack.c.b16 %v2061, %v2060
    %2094 = vmatprep.subr.bf16.mxu0 0
    %2095 = vmatpush1.bf16.msra.mxu0 %v2069
    %2096 = vmatprep.subr.bf16.mxu0 0
    %2097 = vmatpush1.bf16.msra.mxu0 %v2068
    %2098 = vmatprep.subr.bf16.mxu0 0
    %2099 = vmatpush1.bf16.msra.mxu0 %v2067
    %2100 = vmatprep.subr.bf16.mxu0 0
    %2101 = vmatpush1.bf16.msra.mxu0 %v2066
    %2102 = vmatprep.subr.bf16.mxu0 0
    %2103 = vmatpush1.bf16.msra.mxu0 %v2065
    %2104 = vmatprep.subr.bf16.mxu0 0
    %2105 = vmatpush1.bf16.msra.mxu0 %v2064
    %2106 = vmatprep.subr.bf16.mxu0 0
    %2107 = vmatpush1.bf16.msra.mxu0 %v2063
    %2108 = vmatprep.subr.bf16.mxu0 0
    %2109 = vmatpush1.bf16.msra.mxu0 %v2062
    %2110 = vmatprep.subr.bf16.mxu0 0
    %2111 = vmatpush2.bf16.msra.mxu0 %v2077
    %2112 = vmatprep.subr.bf16.mxu0 0
    %2113 = vmatpush2.bf16.msra.mxu0 %v2076
    %2114 = vmatprep.subr.bf16.mxu0 0
    %2115 = vmatpush2.bf16.msra.mxu0 %v2075
    %2116 = vmatprep.subr.bf16.mxu0 0
    %2117 = vmatpush2.bf16.msra.mxu0 %v2074
    %2118 = vmatprep.subr.bf16.mxu0 0
    %2119 = vmatpush2.bf16.msra.mxu0 %v2073
    %2120 = vmatprep.subr.bf16.mxu0 0
    %2121 = vmatpush2.bf16.msra.mxu0 %v2072
    %2122 = vmatprep.subr.bf16.mxu0 0
    %2123 = vmatpush2.bf16.msra.mxu0 %v2071
    %2124 = vmatprep.subr.bf16.mxu0 0
    %2125 = vmatpush2.bf16.msra.mxu0 %v2070
    %2126 = vmatprep.mubr.bf16.mxu0 %v1990
    %2127 = vmatmul.mubr.bf16.gmra.mxu0 %v1989
    %v2128 = vpop.f32.mrf.mxu0
    %v2129 = vadd.f32 %v1996, %v2128
    %v2130 = vpop.f32.mrf.mxu0
    %v2131 = vpop.f32.mrf.mxu0
    %v2132 = vpop.f32.mrf.mxu0
    %2133 = vdwg.mxu0
    %v2134 = vxor.u32 %v2129, 2147483648
    %v2135 = vmul.f32 %v2134, 1.442695
    %v2136 = vpow.pop %v2135
    %v2137 = vadd.f32 %v2136, 1.0
    %v2138 = vrcp.pop %v2137
    %v2139 = vmul.f32 1.0, %v2138
    %v2140 = vmul.f32 %v2129, %v2139
    %v2141 = vld [vmem:[#allocation9] sm:$0xf]
    %v2142 = vld [vmem:[#allocation9 + $0x4] sm:$0xf]
    %v2143 = vld [vmem:[#allocation9 + $0x8] sm:$0xf]
    %v2144 = vld [vmem:[#allocation9 + $0xc] sm:$0xf]
    %v2145 = vld [vmem:[#allocation9 + $0x10] sm:$0xf]
    %v2146 = vld [vmem:[#allocation9 + $0x14] sm:$0xf]
    %v2147 = vld [vmem:[#allocation9 + $0x18] sm:$0xf]
    %v2148 = vld [vmem:[#allocation9 + $0x1c] sm:$0xf]
    %v2149 = vld [vmem:[#allocation9 + $0x20] sm:$0xf]
    %v2150 = vld [vmem:[#allocation9 + $0x24] sm:$0xf]
    %v2151 = vld [vmem:[#allocation9 + $0x28] sm:$0xf]
    %v2152 = vld [vmem:[#allocation9 + $0x2c] sm:$0xf]
    %v2153 = vld [vmem:[#allocation9 + $0x30] sm:$0xf]
    %v2154 = vld [vmem:[#allocation9 + $0x34] sm:$0xf]
    %v2155 = vld [vmem:[#allocation9 + $0x38] sm:$0xf]
    %v2156 = vld [vmem:[#allocation9 + $0x3c] sm:$0xf]
    %v2157 = vpack.c.bf16 %v2140, %v2140
    %v2158 = vld [vmem:[%s12] sm:$0x1]
    %v2160 = vlaneseq
    %v2161 = vshrl.u32 %v2160, 7
    %v2162 = vsub.s32 0, %v2161
    %v2163 = vrot.slane %v2158, %v2162
    %v2181 = vunpack.c.l.b16 %v2141
    %v2182 = vunpack.c.l.b16 %v2142
    %v2183 = vunpack.c.l.b16 %v2143
    %v2184 = vunpack.c.l.b16 %v2144
    %v2185 = vunpack.c.l.b16 %v2145
    %v2186 = vunpack.c.l.b16 %v2146
    %v2187 = vunpack.c.l.b16 %v2147
    %v2188 = vunpack.c.l.b16 %v2148
    %v2189 = vunpack.c.l.b16 %v2149
    %v2190 = vunpack.c.l.b16 %v2150
    %v2191 = vunpack.c.l.b16 %v2151
    %v2192 = vunpack.c.l.b16 %v2152
    %v2193 = vunpack.c.l.b16 %v2153
    %v2194 = vunpack.c.l.b16 %v2154
    %v2195 = vunpack.c.l.b16 %v2155
    %v2196 = vunpack.c.l.b16 %v2156
    %v2197 = vpack.c.b16 %v2182, %v2181
    %v2198 = vpack.c.b16 %v2184, %v2183
    %v2199 = vpack.c.b16 %v2186, %v2185
    %v2200 = vpack.c.b16 %v2188, %v2187
    %v2201 = vpack.c.b16 %v2190, %v2189
    %v2202 = vpack.c.b16 %v2192, %v2191
    %v2203 = vpack.c.b16 %v2194, %v2193
    %v2204 = vpack.c.b16 %v2196, %v2195
    %2213 = vmatprep.subr.bf16.mxu0 0
    %2214 = vmatpush1.bf16.msra.mxu0 %v2204
    %2215 = vmatprep.subr.bf16.mxu0 0
    %2216 = vmatpush1.bf16.msra.mxu0 %v2203
    %2217 = vmatprep.subr.bf16.mxu0 0
    %2218 = vmatpush1.bf16.msra.mxu0 %v2202
    %2219 = vmatprep.subr.bf16.mxu0 0
    %2220 = vmatpush1.bf16.msra.mxu0 %v2201
    %2221 = vmatprep.subr.bf16.mxu0 0
    %2222 = vmatpush1.bf16.msra.mxu0 %v2200
    %2223 = vmatprep.subr.bf16.mxu0 0
    %2224 = vmatpush1.bf16.msra.mxu0 %v2199
    %2225 = vmatprep.subr.bf16.mxu0 0
    %2226 = vmatpush1.bf16.msra.mxu0 %v2198
    %2227 = vmatprep.subr.bf16.mxu0 0
    %2228 = vmatpush1.bf16.msra.mxu0 %v2197
    %2229 = vmatprep.subr.bf16.mxu0 0
    %2230 = vmatpush2.bf16.msra.mxu0 0
    %2231 = vmatprep.subr.bf16.mxu0 0
    %2232 = vmatpush2.bf16.msra.mxu0 0
    %2233 = vmatprep.subr.bf16.mxu0 0
    %2234 = vmatpush2.bf16.msra.mxu0 0
    %2235 = vmatprep.subr.bf16.mxu0 0
    %2236 = vmatpush2.bf16.msra.mxu0 0
    %2237 = vmatprep.subr.bf16.mxu0 0
    %2238 = vmatpush2.bf16.msra.mxu0 0
    %2239 = vmatprep.subr.bf16.mxu0 0
    %2240 = vmatpush2.bf16.msra.mxu0 0
    %2241 = vmatprep.subr.bf16.mxu0 0
    %2242 = vmatpush2.bf16.msra.mxu0 0
    %2243 = vmatprep.subr.bf16.mxu0 0
    %2244 = vmatpush2.bf16.msra.mxu0 0
    %2245 = vmatprep.mubr.bf16.mxu0 0
    %2246 = vmatmul.mubr.bf16.gmra.mxu0 %v2157
    %v2247 = vpop.f32.mrf.mxu0
    %v2248 = vadd.f32 %v2163, %v2247
    %v2249 = vpop.f32.mrf.mxu0
    %v2250 = vpop.f32.mrf.mxu0
    %v2251 = vpop.f32.mrf.mxu0
    %2252 = vdwg.mxu0
    %2253 = vst [vmem:[%s13] sm:$0xff] %v2248
    // Predicated region
    $region74: #{net_forward.1} parent=1 // pred_check
      _
    $region75: #{net_forward.1} parent=1 // pred_check_branch
      %2255 = sbr.rel (0) target = $region77
    $region76: #{net_forward.1} parent=1 // pred_region
      _
    $region77: #{net_forward.1} parent=1 // pred_fallthru
      _
    // Predicated region
    $region78: #{net_forward.1} parent=1 // pred_check
      _
    $region79: #{net_forward.1} parent=1 // pred_check_branch
      %2257 = sbr.rel (0) target = $region81
    $region80: #{net_forward.1} parent=1 // pred_region
      _
    $region81: #{net_forward.1} parent=1 // pred_fallthru
      _
    %2258 = vsyncpa [#allocation3], 1
    %2259 = vsyncpa [#allocation5], 1
    %2260 = vsyncpa [#allocation8], 1

</llo_original>
